<compile_context>
chip_gen: v7x
topology: tpu7x:2x2x1
jax: 0.10.0
libtpu: 0.0.40
codegen_flags: <defaults>
</compile_context>

<pallas_src>
import functools

import jax
import jax.numpy as jnp
import numpy as np
from jax import lax
from jax.experimental import pallas as pl
from jax.experimental.pallas import tpu as pltpu


def _vmem_specs(n):
    return [pl.BlockSpec(memory_space=pltpu.MemorySpace.VMEM) for _ in range(n)]


def _round_up(x, m):
    return ((x + m - 1) // m) * m


# ---------------------------------------------------------------------------
# Fused kernel: char-CNN (Toeplitz matmul + tree-max + ReLU) -> BiLSTM -> Linear+log_softmax
# Inputs (all VMEM resident; matmul weights bf16, biases f32):
#   xch  : (S*Bp, Wp*C)       padded char embeddings, time-major, batch padded to Bp (bf16)
#   convw: (Wp*C, out_len*L)  block-Toeplitz conv weight (bf16)
#   convb: (1, L)
#   wemb : (S*Bp, E)          word embeddings, time-major (f32)
#   wih  : (E+L, 8*Hp)        [fwd | bwd] input->gate weights, gate order [i,f,o,g] (bf16)
#   bih  : (1, 8*Hp)
#   whh  : (2*Hp, 8*Hp)       block-diag(Whh_f, Whh_b), same gate order (bf16)
#   fcw  : (2*Hp, Tp)         stacked [fwd ; bwd] hidden2tag weight (bf16)
#   fcb  : (1, Tp)            padded tag columns biased to -1e30
# Output: (S*Bp, Tp) log-probs (time-major rows, lane-dense Tp).
# ---------------------------------------------------------------------------
def fused_tagger_kernel(xch_ref, convw_ref, convb_ref, wemb_ref, wih_ref, bih_ref,
                        whh_ref, fcw_ref, fcb_ref,
                        out_ref, gin_ref, hs_ref,
                        *, Bp, S, Hp, out_len, L):
    f32 = jnp.float32
    bf16 = jnp.bfloat16
    G = 4 * Hp                                    # per-direction gate width (multiple of 128)

    # ---- 1) char CNN: block-Toeplitz matmul, pairwise-tree max-over-time, ReLU ----
    conv = jnp.dot(xch_ref[...], convw_ref[...], preferred_element_type=f32)  # (S*Bp, out_len*L)
    slices = [conv[:, w * L:(w + 1) * L] for w in range(out_len)]
    while len(slices) > 1:                        # tree reduction: ~log2(out_len) levels
        nxt = [jnp.maximum(slices[i], slices[i + 1]) for i in range(0, len(slices) - 1, 2)]
        if len(slices) % 2:
            nxt.append(slices[-1])
        slices = nxt
    # ReLU after the max is exact (ReLU monotone, bias constant over time).
    pool = jnp.maximum(slices[0] + convb_ref[...], 0.0)                       # (S*Bp, L)

    # ---- 2) hoisted LSTM input projection: one matmul, all timesteps, both dirs ----
    x_cat = jnp.concatenate([wemb_ref[...], pool], axis=1).astype(bf16)       # (S*Bp, E+L)
    gin_ref[...] = (jnp.dot(x_cat, wih_ref[...], preferred_element_type=f32)
                    + bih_ref[...])                                           # (S*Bp, 8*Hp)

    whh = whh_ref[...]                            # (2Hp, 8Hp) block-diag recurrent weight

    zeros_h = jnp.zeros((Bp, Hp), f32)

    def step(t, carry):
        h_fb, c_f, c_b = carry                    # h_fb: (Bp, 2Hp) bf16 = [h_f | h_b]
        # single block-diagonal recurrent matmul for BOTH directions
        rec = jnp.dot(h_fb, whh, preferred_element_type=f32)                  # (Bp, 8Hp)
        rf = pl.multiple_of(t * Bp, Bp)                                       # fwd: time t
        rb = pl.multiple_of((S - 1 - t) * Bp, Bp)                             # bwd: time S-1-t
        gf = gin_ref[pl.ds(rf, Bp), pl.ds(0, G)] + rec[:, 0:G]
        gb = gin_ref[pl.ds(rb, Bp), pl.ds(G, G)] + rec[:, G:2 * G]
        # gate order [i, f, o, g]: one wide sigmoid per direction covers i,f,o
        sf = jax.nn.sigmoid(gf[:, 0:3 * Hp])
        sb = jax.nn.sigmoid(gb[:, 0:3 * Hp])
        c_f = sf[:, Hp:2 * Hp] * c_f + sf[:, 0:Hp] * jnp.tanh(gf[:, 3 * Hp:4 * Hp])
        c_b = sb[:, Hp:2 * Hp] * c_b + sb[:, 0:Hp] * jnp.tanh(gb[:, 3 * Hp:4 * Hp])
        h_f = sf[:, 2 * Hp:3 * Hp] * jnp.tanh(c_f)
        h_b = sb[:, 2 * Hp:3 * Hp] * jnp.tanh(c_b)
        hs_ref[pl.ds(rf, Bp), pl.ds(0, Hp)] = h_f
        hs_ref[pl.ds(rb, Bp), pl.ds(Hp, Hp)] = h_b
        h_fb = jnp.concatenate([h_f, h_b], axis=1).astype(bf16)               # next-step LHS
        return h_fb, c_f, c_b

    carry0 = (jnp.zeros((Bp, 2 * Hp), bf16), zeros_h, zeros_h)
    lax.fori_loop(0, S, step, carry0, unroll=True)   # cap unroll if S grows (vreg pressure)

    # ---- 3) hidden2tag (single stacked matmul) + log_softmax (lane-dense Tp) ----
    logits = (jnp.dot(hs_ref[...].astype(bf16), fcw_ref[...], preferred_element_type=f32)
              + fcb_ref[...])
    m = jnp.max(logits, axis=-1, keepdims=True)
    z = logits - m
    lse = jnp.log(jnp.sum(jnp.exp(z), axis=-1, keepdims=True))
    out_ref[...] = z - lse


# ---------------------------------------------------------------------------
# One-time parameter preparation: gate reorder [i,f,g,o]->[i,f,o,g], H->Hp / T->Tp padding,
# block-diag Whh, stacked input/FC weights, block-Toeplitz conv weight, bf16 casts.
# ---------------------------------------------------------------------------
def prepare_params(p, *, hidden_dim, window, word_len):
    H = hidden_dim
    Hp = _round_up(H, 32)                 # 4*Hp is a multiple of 128 lanes
    E = p["word_emb"].shape[1]
    C = p["char_emb"].shape[1]
    _, _, L = p["conv_w"].shape
    T = p["fc_wt"].shape[-1]
    Tp = _round_up(T, 128)
    bf16 = jnp.bfloat16

    def reorder_pad_gates(w):
        # (lead, 4H) in torch order [i|f|g|o] -> (lead, 4Hp) in order [i|f|o|g], zero-padded
        lead = w.shape[0]
        w4 = w.reshape(lead, 4, H)
        w4 = w4[:, jnp.array([0, 1, 3, 2]), :]
        w4 = jnp.pad(w4, ((0, 0), (0, 0), (0, Hp - H)))
        return w4.reshape(lead, 4 * Hp)

    # stacked input projection weight (E+L, 8Hp): cols 0:4Hp fwd, 4Hp:8Hp bwd
    wih = jnp.concatenate([reorder_pad_gates(p["wih_f"]),
                           reorder_pad_gates(p["wih_b"])], axis=1)
    b_ih = jnp.concatenate([reorder_pad_gates(p["b_f"]),
                            reorder_pad_gates(p["b_b"])], axis=1)

    # block-diagonal recurrent weight (2Hp, 8Hp)
    whh_f = jnp.pad(reorder_pad_gates(p["whh_f"]), ((0, Hp - H), (0, 0)))     # (Hp, 4Hp)
    whh_b = jnp.pad(reorder_pad_gates(p["whh_b"]), ((0, Hp - H), (0, 0)))
    whh = jnp.zeros((2 * Hp, 8 * Hp), jnp.float32)
    whh = whh.at[:Hp, :4 * Hp].set(whh_f).at[Hp:, 4 * Hp:].set(whh_b)

    # stacked FC weight (2Hp, Tp): rows 0:Hp fwd hidden, Hp:2Hp bwd hidden
    fc_wf = jnp.pad(p["fc_wt"][:H], ((0, Hp - H), (0, Tp - T)))
    fc_wb = jnp.pad(p["fc_wt"][H:], ((0, Hp - H), (0, Tp - T)))
    fc_w = jnp.concatenate([fc_wf, fc_wb], axis=0)
    fc_b = jnp.pad(p["fc_b"], ((0, 0), (0, Tp - T)), constant_values=-1e30)

    # block-Toeplitz conv weight (built once; depends only on static window/C/L/word_len)
    pad = (window - 1) // 2
    Wp = word_len + 2 * pad
    out_len = Wp - window + 1
    conv_flat = p["conv_w"].reshape(window * C, L)        # rows indexed k*C + c
    w_toe = jnp.zeros((Wp * C, out_len * L), jnp.float32)
    for w in range(out_len):
        w_toe = w_toe.at[w * C:(w + window) * C, w * L:(w + 1) * L].set(conv_flat)

    return dict(
        char_emb=p["char_emb"], word_emb=p["word_emb"],
        conv_toe=w_toe.astype(bf16), conv_b=p["conv_b"],
        wih=wih.astype(bf16), b_ih=b_ih,
        whh=whh.astype(bf16),
        fc_w=fc_w.astype(bf16), fc_b=fc_b,
    )


# ---------------------------------------------------------------------------
# Forward wrapper: embedding gathers + time-major / batch-padded layout glue,
# single fused pallas_call.
# ---------------------------------------------------------------------------
def final_model_forward(prep, batch_sentence, batch_words, *, window, tagset_size):
    B, S = batch_sentence.shape
    _, W = batch_words.shape
    C = prep["char_emb"].shape[1]
    E = prep["word_emb"].shape[1]
    L = prep["conv_b"].shape[1]
    Hp = prep["whh"].shape[0] // 2
    Tp = prep["fc_b"].shape[1]
    Bp = _round_up(B, 8)                 # full sublane tile per timestep
    pad = (window - 1) // 2
    Wp = W + 2 * pad
    out_len = Wp - window + 1            # PyTorch Conv1d output length
    assert prep["conv_toe"].shape == (Wp * C, out_len * L), "prep built for different word_len"
    bf16 = jnp.bfloat16

    # word embeddings -> (S*Bp, E), time-major, padded batch (f32; concat+cast in kernel)
    wemb = prep["word_emb"][batch_sentence]                       # (B, S, E)
    wemb = jnp.transpose(wemb, (1, 0, 2))
    wemb = jnp.pad(wemb, ((0, 0), (0, Bp - B), (0, 0))).reshape(S * Bp, E)

    # char embeddings -> flattened padded sequence per word, same (S*Bp) row order
    chars = prep["char_emb"][batch_words]                         # (B*S, W, C)
    chars = jnp.pad(chars, ((0, 0), (pad, pad), (0, 0)))          # (B*S, Wp, C)
    xch = chars.reshape(B, S, Wp * C)
    xch = jnp.transpose(xch, (1, 0, 2))
    xch = jnp.pad(xch, ((0, 0), (0, Bp - B), (0, 0)))
    xch = xch.reshape(S * Bp, Wp * C).astype(bf16)

    kern = functools.partial(fused_tagger_kernel,
                             Bp=Bp, S=S, Hp=Hp, out_len=out_len, L=L)
    out = pl.pallas_call(
        kern,
        out_shape=jax.ShapeDtypeStruct((S * Bp, Tp), jnp.float32),
        in_specs=_vmem_specs(9),
        out_specs=pl.BlockSpec(memory_space=pltpu.MemorySpace.VMEM),
        scratch_shapes=[
            pltpu.VMEM((S * Bp, 8 * Hp), jnp.float32),   # hoisted gate projections
            pltpu.VMEM((S * Bp, 2 * Hp), jnp.float32),   # merged [fwd | bwd] hiddens
        ],
        compiler_params=pltpu.CompilerParams(vmem_limit_bytes=32 * 1024 * 1024),
    )(xch, prep["conv_toe"], prep["conv_b"], wemb, prep["wih"], prep["b_ih"],
      prep["whh"], prep["fc_w"], prep["fc_b"])

    out = out.reshape(S, Bp, Tp)[:, :B, :tagset_size]             # drop batch/tag padding
    return jnp.transpose(out, (1, 0, 2))                          # (B, S, T)


# ---------------------------------------------------------------------------
# Deterministic parameter init (shapes follow FinalModel.__init__).
# LSTM biases b_ih + b_hh are folded into a single bias per direction.
# ---------------------------------------------------------------------------
def init_params(key, char_emb_dim, word_emb_dim, hidden_dim, vocab_size,
                charset_size, tagset_size, window, l):
    ks = jax.random.split(key, 12)
    s = 0.1
    H, D = hidden_dim, word_emb_dim + l
    return dict(
        char_emb=s * jax.random.normal(ks[0], (charset_size, char_emb_dim), jnp.float32),
        word_emb=s * jax.random.normal(ks[1], (vocab_size, word_emb_dim), jnp.float32),
        # stored as (window, C_in, L) == transpose of torch's (L, C_in, window)
        conv_w=s * jax.random.normal(ks[2], (window, char_emb_dim, l), jnp.float32),
        conv_b=s * jax.random.normal(ks[3], (1, l), jnp.float32),
        wih_f=s * jax.random.normal(ks[4], (D, 4 * H), jnp.float32),
        whh_f=s * jax.random.normal(ks[5], (H, 4 * H), jnp.float32),
        b_f=s * jax.random.normal(ks[6], (1, 4 * H), jnp.float32),
        wih_b=s * jax.random.normal(ks[7], (D, 4 * H), jnp.float32),
        whh_b=s * jax.random.normal(ks[8], (H, 4 * H), jnp.float32),
        b_b=s * jax.random.normal(ks[9], (1, 4 * H), jnp.float32),
        fc_wt=s * jax.random.normal(ks[10], (2 * H, tagset_size), jnp.float32),
        fc_b=s * jax.random.normal(ks[11], (1, tagset_size), jnp.float32),
    )


# ---------------------------------------------------------------------------
# Pure-JAX f32 reference of the same math (correctness check).
# ---------------------------------------------------------------------------
def reference_forward(params, batch_sentence, batch_words, *, window, hidden_dim):
    B, S = batch_sentence.shape
    N, W = batch_words.shape
    H = hidden_dim
    chars = params["char_emb"][batch_words]
    pad = (window - 1) // 2
    xpad = jnp.pad(chars, ((0, 0), (pad, pad), (0, 0)))
    out_len = W + 2 * pad - window + 1
    L = params["conv_w"].shape[-1]
    conv = jnp.zeros((N, out_len, L), jnp.float32)
    for k in range(window):
        conv = conv + jnp.einsum("nwc,cl->nwl", xpad[:, k:k + out_len, :],
                                 params["conv_w"][k])
    conv = jnp.maximum(conv + params["conv_b"][None, :, :], 0.0)
    pool = jnp.max(conv, axis=1)
    cnn_vecs = pool.reshape(B, S, L)
    word_embeds = params["word_emb"][batch_sentence]
    x = jnp.concatenate([word_embeds, cnn_vecs], axis=2)

    def cell(x_t, h, c, wih, whh, b):
        gates = x_t @ wih + h @ whh + b
        i = jax.nn.sigmoid(gates[:, :H]); f = jax.nn.sigmoid(gates[:, H:2 * H])
        g = jnp.tanh(gates[:, 2 * H:3 * H]); o = jax.nn.sigmoid(gates[:, 3 * H:])
        c = f * c + i * g
        return o * jnp.tanh(c), c

    h = jnp.zeros((B, H)); c = jnp.zeros((B, H)); outs_f = []
    for t in range(S):
        h, c = cell(x[:, t], h, c, params["wih_f"], params["whh_f"], params["b_f"])
        outs_f.append(h)
    h = jnp.zeros((B, H)); c = jnp.zeros((B, H)); outs_b = [None] * S
    for t in range(S - 1, -1, -1):
        h, c = cell(x[:, t], h, c, params["wih_b"], params["whh_b"], params["b_b"])
        outs_b[t] = h
    lstm_out = jnp.concatenate([jnp.stack(outs_f, 1), jnp.stack(outs_b, 1)], axis=-1)
    logits = lstm_out @ params["fc_wt"] + params["fc_b"][0]
    return jax.nn.log_softmax(logits, axis=-1)


if __name__ == "__main__":
    # Small shapes consistent with the module's forward.
    char_emb_dim, word_emb_dim, hidden_dim = 8, 16, 16
    vocab_size, charset_size, tagset_size = 50, 30, 10
    window, num_filters = 3, 8
    B, S, W = 2, 8, 12            # batch, words/sentence, chars/word

    key = jax.random.PRNGKey(0)
    kp, ksent, kword = jax.random.split(key, 3)
    params = init_params(kp, char_emb_dim, word_emb_dim, hidden_dim,
                         vocab_size, charset_size, tagset_size, window, num_filters)
    batch_sentence = jax.random.randint(ksent, (B, S), 0, vocab_size, dtype=jnp.int32)
    batch_words = jax.random.randint(kword, (B * S, W), 0, charset_size, dtype=jnp.int32)

    prep = prepare_params(params, hidden_dim=hidden_dim, window=window, word_len=W)
    fwd = jax.jit(functools.partial(final_model_forward,
                                    window=window, tagset_size=tagset_size))
    out = fwd(prep, batch_sentence, batch_words)
    out = jax.block_until_ready(out)
    assert out.shape == (B, S, tagset_size)

    ref = reference_forward(params, batch_sentence, batch_words,
                            window=window, hidden_dim=hidden_dim)
    np.testing.assert_allclose(np.asarray(out), np.asarray(ref), rtol=2e-2, atol=5e-3)

    print("KERNEL_OK")
</pallas_src>

<mosaic_0001>
module attributes {stable_mosaic.version = 11 : i64} {
  func.func @fused_tagger_kernel(%arg0: memref<64x112xbf16, #tpu.memory_space<vmem>>, %arg1: memref<112x96xbf16, #tpu.memory_space<vmem>>, %arg2: memref<1x8xf32, #tpu.memory_space<vmem>>, %arg3: memref<64x16xf32, #tpu.memory_space<vmem>>, %arg4: memref<24x256xbf16, #tpu.memory_space<vmem>>, %arg5: memref<1x256xf32, #tpu.memory_space<vmem>>, %arg6: memref<64x256xbf16, #tpu.memory_space<vmem>>, %arg7: memref<64x128xbf16, #tpu.memory_space<vmem>>, %arg8: memref<1x128xf32, #tpu.memory_space<vmem>>, %arg9: memref<64x128xf32, #tpu.memory_space<vmem>>, %arg10: memref<64x256xf32, #tpu.memory_space<vmem>>, %arg11: memref<64x64xf32, #tpu.memory_space<vmem>>) attributes {dimension_semantics = [], scalar_prefetch = 0 : i64, scratch_operands = 2 : i64, tpu.core_type = #tpu.core_type<tc>} {
    %c0 = arith.constant 0 : index
    %c0_0 = arith.constant 0 : index
    %0 = vector.load %arg0[%c0, %c0_0] : memref<64x112xbf16, #tpu.memory_space<vmem>>, vector<64x112xbf16>
    %c0_1 = arith.constant 0 : index
    %c0_2 = arith.constant 0 : index
    %1 = vector.load %arg1[%c0_1, %c0_2] : memref<112x96xbf16, #tpu.memory_space<vmem>>, vector<112x96xbf16>
    %cst = arith.constant dense<0.000000e+00> : vector<64x96xf32>
    %2 = tpu.matmul %0, %1, %cst {dimension_numbers = #tpu.dot_dimension_numbers<[1], [0], [0], [1], [0, 0, 1, 1], [], []>} : vector<64x112xbf16>, vector<112x96xbf16>, vector<64x96xf32> -> vector<64x96xf32>
    %3 = vector.extract_strided_slice %2 {offsets = [0, 0], sizes = [64, 8], strides = [1, 1]} : vector<64x96xf32> to vector<64x8xf32>
    %4 = vector.extract_strided_slice %2 {offsets = [0, 8], sizes = [64, 8], strides = [1, 1]} : vector<64x96xf32> to vector<64x8xf32>
    %5 = vector.extract_strided_slice %2 {offsets = [0, 16], sizes = [64, 8], strides = [1, 1]} : vector<64x96xf32> to vector<64x8xf32>
    %6 = vector.extract_strided_slice %2 {offsets = [0, 24], sizes = [64, 8], strides = [1, 1]} : vector<64x96xf32> to vector<64x8xf32>
    %7 = vector.extract_strided_slice %2 {offsets = [0, 32], sizes = [64, 8], strides = [1, 1]} : vector<64x96xf32> to vector<64x8xf32>
    %8 = vector.extract_strided_slice %2 {offsets = [0, 40], sizes = [64, 8], strides = [1, 1]} : vector<64x96xf32> to vector<64x8xf32>
    %9 = vector.extract_strided_slice %2 {offsets = [0, 48], sizes = [64, 8], strides = [1, 1]} : vector<64x96xf32> to vector<64x8xf32>
    %10 = vector.extract_strided_slice %2 {offsets = [0, 56], sizes = [64, 8], strides = [1, 1]} : vector<64x96xf32> to vector<64x8xf32>
    %11 = vector.extract_strided_slice %2 {offsets = [0, 64], sizes = [64, 8], strides = [1, 1]} : vector<64x96xf32> to vector<64x8xf32>
    %12 = vector.extract_strided_slice %2 {offsets = [0, 72], sizes = [64, 8], strides = [1, 1]} : vector<64x96xf32> to vector<64x8xf32>
    %13 = vector.extract_strided_slice %2 {offsets = [0, 80], sizes = [64, 8], strides = [1, 1]} : vector<64x96xf32> to vector<64x8xf32>
    %14 = vector.extract_strided_slice %2 {offsets = [0, 88], sizes = [64, 8], strides = [1, 1]} : vector<64x96xf32> to vector<64x8xf32>
    %15 = arith.maximumf %3, %4 : vector<64x8xf32>
    %16 = arith.maximumf %5, %6 : vector<64x8xf32>
    %17 = arith.maximumf %7, %8 : vector<64x8xf32>
    %18 = arith.maximumf %9, %10 : vector<64x8xf32>
    %19 = arith.maximumf %11, %12 : vector<64x8xf32>
    %20 = arith.maximumf %13, %14 : vector<64x8xf32>
    %21 = arith.maximumf %15, %16 : vector<64x8xf32>
    %22 = arith.maximumf %17, %18 : vector<64x8xf32>
    %23 = arith.maximumf %19, %20 : vector<64x8xf32>
    %24 = arith.maximumf %21, %22 : vector<64x8xf32>
    %25 = arith.maximumf %24, %23 : vector<64x8xf32>
    %c0_3 = arith.constant 0 : index
    %c0_4 = arith.constant 0 : index
    %26 = vector.load %arg2[%c0_3, %c0_4] : memref<1x8xf32, #tpu.memory_space<vmem>>, vector<1x8xf32>
    %27 = vector.broadcast %26 : vector<1x8xf32> to vector<64x8xf32>
    %28 = arith.addf %25, %27 : vector<64x8xf32>
    %cst_5 = arith.constant 0.000000e+00 : f32
    %29 = vector.broadcast %cst_5 : f32 to vector<64x8xf32>
    %30 = arith.maximumf %28, %29 : vector<64x8xf32>
    %c0_6 = arith.constant 0 : index
    %c0_7 = arith.constant 0 : index
    %31 = vector.load %arg3[%c0_6, %c0_7] : memref<64x16xf32, #tpu.memory_space<vmem>>, vector<64x16xf32>
    %32 = tpu.concatenate %31, %30 in 1 : vector<64x16xf32>, vector<64x8xf32> -> vector<64x24xf32>
    %33 = arith.truncf %32 : vector<64x24xf32> to vector<64x24xbf16>
    %c0_8 = arith.constant 0 : index
    %c0_9 = arith.constant 0 : index
    %34 = vector.load %arg4[%c0_8, %c0_9] : memref<24x256xbf16, #tpu.memory_space<vmem>>, vector<24x256xbf16>
    %cst_10 = arith.constant dense<0.000000e+00> : vector<64x256xf32>
    %35 = tpu.matmul %33, %34, %cst_10 {dimension_numbers = #tpu.dot_dimension_numbers<[1], [0], [0], [1], [0, 0, 1, 1], [], []>} : vector<64x24xbf16>, vector<24x256xbf16>, vector<64x256xf32> -> vector<64x256xf32>
    %c0_11 = arith.constant 0 : index
    %c0_12 = arith.constant 0 : index
    %36 = vector.load %arg5[%c0_11, %c0_12] : memref<1x256xf32, #tpu.memory_space<vmem>>, vector<1x256xf32>
    %37 = vector.broadcast %36 : vector<1x256xf32> to vector<64x256xf32>
    %38 = arith.addf %35, %37 : vector<64x256xf32>
    %c0_13 = arith.constant 0 : index
    %c0_14 = arith.constant 0 : index
    %39 = vector.load %arg10[%c0_13, %c0_14] : memref<64x256xf32, #tpu.memory_space<vmem>>, vector<64x256xf32>
    tpu.vector_store %arg10[%c0_13, %c0_14], %38 {strides = array<i32>} : memref<64x256xf32, #tpu.memory_space<vmem>>, vector<64x256xf32>,
    %c0_15 = arith.constant 0 : index
    %c0_16 = arith.constant 0 : index
    %40 = vector.load %arg6[%c0_15, %c0_16] : memref<64x256xbf16, #tpu.memory_space<vmem>>, vector<64x256xbf16>
    %cst_17 = arith.constant 0.000000e+00 : f32
    %41 = vector.broadcast %cst_17 : f32 to vector<8x32xf32>
    %cst_18 = arith.constant 0.000000e+00 : bf16
    %42 = vector.broadcast %cst_18 : bf16 to vector<8x64xbf16>
    %c0_i32 = arith.constant 0 : i32
    %cst_19 = arith.constant dense<0.000000e+00> : vector<8x256xf32>
    %43 = tpu.matmul %42, %40, %cst_19 {dimension_numbers = #tpu.dot_dimension_numbers<[1], [0], [0], [1], [0, 0, 1, 1], [], []>} : vector<8x64xbf16>, vector<64x256xbf16>, vector<8x256xf32> -> vector<8x256xf32>
    %c8_i32 = arith.constant 8 : i32
    %44 = arith.muli %c0_i32, %c8_i32 : i32
    %45 = tpu.assume_multiple %44, 8 : i32
    %c7_i32 = arith.constant 7 : i32
    %46 = arith.subi %c7_i32, %c0_i32 : i32
    %c8_i32_20 = arith.constant 8 : i32
    %47 = arith.muli %46, %c8_i32_20 : i32
    %48 = tpu.assume_multiple %47, 8 : i32
    %49 = arith.index_cast %45 : i32 to index
    %c0_21 = arith.constant 0 : index
    %50 = vector.load %arg10[%49, %c0_21] : memref<64x256xf32, #tpu.memory_space<vmem>>, vector<8x128xf32>
    %51 = vector.extract_strided_slice %43 {offsets = [0, 0], sizes = [8, 128], strides = [1, 1]} : vector<8x256xf32> to vector<8x128xf32>
    %52 = arith.addf %50, %51 : vector<8x128xf32>
    %53 = arith.index_cast %48 : i32 to index
    %c128 = arith.constant 128 : index
    %54 = vector.load %arg10[%53, %c128] : memref<64x256xf32, #tpu.memory_space<vmem>>, vector<8x128xf32>
    %55 = vector.extract_strided_slice %43 {offsets = [0, 128], sizes = [8, 128], strides = [1, 1]} : vector<8x256xf32> to vector<8x128xf32>
    %56 = arith.addf %54, %55 : vector<8x128xf32>
    %57 = vector.extract_strided_slice %52 {offsets = [0, 0], sizes = [8, 96], strides = [1, 1]} : vector<8x128xf32> to vector<8x96xf32>
    %58 = arith.negf %57 : vector<8x96xf32>
    %59 = math.exp %58 : vector<8x96xf32>
    %cst_22 = arith.constant 1.000000e+00 : f32
    %60 = vector.broadcast %cst_22 : f32 to vector<8x96xf32>
    %61 = arith.addf %60, %59 : vector<8x96xf32>
    %62 = arith.divf %60, %61 : vector<8x96xf32>
    %63 = vector.extract_strided_slice %56 {offsets = [0, 0], sizes = [8, 96], strides = [1, 1]} : vector<8x128xf32> to vector<8x96xf32>
    %64 = arith.negf %63 : vector<8x96xf32>
    %65 = math.exp %64 : vector<8x96xf32>
    %cst_23 = arith.constant 1.000000e+00 : f32
    %66 = vector.broadcast %cst_23 : f32 to vector<8x96xf32>
    %67 = arith.addf %66, %65 : vector<8x96xf32>
    %68 = arith.divf %66, %67 : vector<8x96xf32>
    %69 = vector.extract_strided_slice %62 {offsets = [0, 32], sizes = [8, 32], strides = [1, 1]} : vector<8x96xf32> to vector<8x32xf32>
    %70 = arith.mulf %69, %41 : vector<8x32xf32>
    %71 = vector.extract_strided_slice %62 {offsets = [0, 0], sizes = [8, 32], strides = [1, 1]} : vector<8x96xf32> to vector<8x32xf32>
    %72 = vector.extract_strided_slice %52 {offsets = [0, 96], sizes = [8, 32], strides = [1, 1]} : vector<8x128xf32> to vector<8x32xf32>
    %73 = math.tanh %72 : vector<8x32xf32>
    %74 = arith.mulf %71, %73 : vector<8x32xf32>
    %75 = arith.addf %70, %74 : vector<8x32xf32>
    %76 = vector.extract_strided_slice %68 {offsets = [0, 32], sizes = [8, 32], strides = [1, 1]} : vector<8x96xf32> to vector<8x32xf32>
    %77 = arith.mulf %76, %41 : vector<8x32xf32>
    %78 = vector.extract_strided_slice %68 {offsets = [0, 0], sizes = [8, 32], strides = [1, 1]} : vector<8x96xf32> to vector<8x32xf32>
    %79 = vector.extract_strided_slice %56 {offsets = [0, 96], sizes = [8, 32], strides = [1, 1]} : vector<8x128xf32> to vector<8x32xf32>
    %80 = math.tanh %79 : vector<8x32xf32>
    %81 = arith.mulf %78, %80 : vector<8x32xf32>
    %82 = arith.addf %77, %81 : vector<8x32xf32>
    %83 = vector.extract_strided_slice %62 {offsets = [0, 64], sizes = [8, 32], strides = [1, 1]} : vector<8x96xf32> to vector<8x32xf32>
    %84 = math.tanh %75 : vector<8x32xf32>
    %85 = arith.mulf %83, %84 : vector<8x32xf32>
    %86 = vector.extract_strided_slice %68 {offsets = [0, 64], sizes = [8, 32], strides = [1, 1]} : vector<8x96xf32> to vector<8x32xf32>
    %87 = math.tanh %82 : vector<8x32xf32>
    %88 = arith.mulf %86, %87 : vector<8x32xf32>
    %89 = arith.index_cast %45 : i32 to index
    %c0_24 = arith.constant 0 : index
    %90 = vector.load %arg11[%89, %c0_24] : memref<64x64xf32, #tpu.memory_space<vmem>>, vector<8x32xf32>
    tpu.vector_store %arg11[%89, %c0_24], %85 {strides = array<i32>} : memref<64x64xf32, #tpu.memory_space<vmem>>, vector<8x32xf32>,
    %91 = arith.index_cast %48 : i32 to index
    %c32 = arith.constant 32 : index
    %92 = vector.load %arg11[%91, %c32] : memref<64x64xf32, #tpu.memory_space<vmem>>, vector<8x32xf32>
    tpu.vector_store %arg11[%91, %c32], %88 {strides = array<i32>} : memref<64x64xf32, #tpu.memory_space<vmem>>, vector<8x32xf32>,
    %93 = tpu.concatenate %85, %88 in 1 : vector<8x32xf32>, vector<8x32xf32> -> vector<8x64xf32>
    %94 = arith.truncf %93 : vector<8x64xf32> to vector<8x64xbf16>
    %c1_i32 = arith.constant 1 : i32
    %cst_25 = arith.constant dense<0.000000e+00> : vector<8x256xf32>
    %95 = tpu.matmul %94, %40, %cst_25 {dimension_numbers = #tpu.dot_dimension_numbers<[1], [0], [0], [1], [0, 0, 1, 1], [], []>} : vector<8x64xbf16>, vector<64x256xbf16>, vector<8x256xf32> -> vector<8x256xf32>
    %c8_i32_26 = arith.constant 8 : i32
    %96 = arith.muli %c1_i32, %c8_i32_26 : i32
    %97 = tpu.assume_multiple %96, 8 : i32
    %c7_i32_27 = arith.constant 7 : i32
    %98 = arith.subi %c7_i32_27, %c1_i32 : i32
    %c8_i32_28 = arith.constant 8 : i32
    %99 = arith.muli %98, %c8_i32_28 : i32
    %100 = tpu.assume_multiple %99, 8 : i32
    %101 = arith.index_cast %97 : i32 to index
    %c0_29 = arith.constant 0 : index
    %102 = vector.load %arg10[%101, %c0_29] : memref<64x256xf32, #tpu.memory_space<vmem>>, vector<8x128xf32>
    %103 = vector.extract_strided_slice %95 {offsets = [0, 0], sizes = [8, 128], strides = [1, 1]} : vector<8x256xf32> to vector<8x128xf32>
    %104 = arith.addf %102, %103 : vector<8x128xf32>
    %105 = arith.index_cast %100 : i32 to index
    %c128_30 = arith.constant 128 : index
    %106 = vector.load %arg10[%105, %c128_30] : memref<64x256xf32, #tpu.memory_space<vmem>>, vector<8x128xf32>
    %107 = vector.extract_strided_slice %95 {offsets = [0, 128], sizes = [8, 128], strides = [1, 1]} : vector<8x256xf32> to vector<8x128xf32>
    %108 = arith.addf %106, %107 : vector<8x128xf32>
    %109 = vector.extract_strided_slice %104 {offsets = [0, 0], sizes = [8, 96], strides = [1, 1]} : vector<8x128xf32> to vector<8x96xf32>
    %110 = arith.negf %109 : vector<8x96xf32>
    %111 = math.exp %110 : vector<8x96xf32>
    %cst_31 = arith.constant 1.000000e+00 : f32
    %112 = vector.broadcast %cst_31 : f32 to vector<8x96xf32>
    %113 = arith.addf %112, %111 : vector<8x96xf32>
    %114 = arith.divf %112, %113 : vector<8x96xf32>
    %115 = vector.extract_strided_slice %108 {offsets = [0, 0], sizes = [8, 96], strides = [1, 1]} : vector<8x128xf32> to vector<8x96xf32>
    %116 = arith.negf %115 : vector<8x96xf32>
    %117 = math.exp %116 : vector<8x96xf32>
    %cst_32 = arith.constant 1.000000e+00 : f32
    %118 = vector.broadcast %cst_32 : f32 to vector<8x96xf32>
    %119 = arith.addf %118, %117 : vector<8x96xf32>
    %120 = arith.divf %118, %119 : vector<8x96xf32>
    %121 = vector.extract_strided_slice %114 {offsets = [0, 32], sizes = [8, 32], strides = [1, 1]} : vector<8x96xf32> to vector<8x32xf32>
    %122 = arith.mulf %121, %75 : vector<8x32xf32>
    %123 = vector.extract_strided_slice %114 {offsets = [0, 0], sizes = [8, 32], strides = [1, 1]} : vector<8x96xf32> to vector<8x32xf32>
    %124 = vector.extract_strided_slice %104 {offsets = [0, 96], sizes = [8, 32], strides = [1, 1]} : vector<8x128xf32> to vector<8x32xf32>
    %125 = math.tanh %124 : vector<8x32xf32>
    %126 = arith.mulf %123, %125 : vector<8x32xf32>
    %127 = arith.addf %122, %126 : vector<8x32xf32>
    %128 = vector.extract_strided_slice %120 {offsets = [0, 32], sizes = [8, 32], strides = [1, 1]} : vector<8x96xf32> to vector<8x32xf32>
    %129 = arith.mulf %128, %82 : vector<8x32xf32>
    %130 = vector.extract_strided_slice %120 {offsets = [0, 0], sizes = [8, 32], strides = [1, 1]} : vector<8x96xf32> to vector<8x32xf32>
    %131 = vector.extract_strided_slice %108 {offsets = [0, 96], sizes = [8, 32], strides = [1, 1]} : vector<8x128xf32> to vector<8x32xf32>
    %132 = math.tanh %131 : vector<8x32xf32>
    %133 = arith.mulf %130, %132 : vector<8x32xf32>
    %134 = arith.addf %129, %133 : vector<8x32xf32>
    %135 = vector.extract_strided_slice %114 {offsets = [0, 64], sizes = [8, 32], strides = [1, 1]} : vector<8x96xf32> to vector<8x32xf32>
    %136 = math.tanh %127 : vector<8x32xf32>
    %137 = arith.mulf %135, %136 : vector<8x32xf32>
    %138 = vector.extract_strided_slice %120 {offsets = [0, 64], sizes = [8, 32], strides = [1, 1]} : vector<8x96xf32> to vector<8x32xf32>
    %139 = math.tanh %134 : vector<8x32xf32>
    %140 = arith.mulf %138, %139 : vector<8x32xf32>
    %141 = arith.index_cast %97 : i32 to index
    %c0_33 = arith.constant 0 : index
    %142 = vector.load %arg11[%141, %c0_33] : memref<64x64xf32, #tpu.memory_space<vmem>>, vector<8x32xf32>
    tpu.vector_store %arg11[%141, %c0_33], %137 {strides = array<i32>} : memref<64x64xf32, #tpu.memory_space<vmem>>, vector<8x32xf32>,
    %143 = arith.index_cast %100 : i32 to index
    %c32_34 = arith.constant 32 : index
    %144 = vector.load %arg11[%143, %c32_34] : memref<64x64xf32, #tpu.memory_space<vmem>>, vector<8x32xf32>
    tpu.vector_store %arg11[%143, %c32_34], %140 {strides = array<i32>} : memref<64x64xf32, #tpu.memory_space<vmem>>, vector<8x32xf32>,
    %145 = tpu.concatenate %137, %140 in 1 : vector<8x32xf32>, vector<8x32xf32> -> vector<8x64xf32>
    %146 = arith.truncf %145 : vector<8x64xf32> to vector<8x64xbf16>
    %c2_i32 = arith.constant 2 : i32
    %cst_35 = arith.constant dense<0.000000e+00> : vector<8x256xf32>
    %147 = tpu.matmul %146, %40, %cst_35 {dimension_numbers = #tpu.dot_dimension_numbers<[1], [0], [0], [1], [0, 0, 1, 1], [], []>} : vector<8x64xbf16>, vector<64x256xbf16>, vector<8x256xf32> -> vector<8x256xf32>
    %c8_i32_36 = arith.constant 8 : i32
    %148 = arith.muli %c2_i32, %c8_i32_36 : i32
    %149 = tpu.assume_multiple %148, 8 : i32
    %c7_i32_37 = arith.constant 7 : i32
    %150 = arith.subi %c7_i32_37, %c2_i32 : i32
    %c8_i32_38 = arith.constant 8 : i32
    %151 = arith.muli %150, %c8_i32_38 : i32
    %152 = tpu.assume_multiple %151, 8 : i32
    %153 = arith.index_cast %149 : i32 to index
    %c0_39 = arith.constant 0 : index
    %154 = vector.load %arg10[%153, %c0_39] : memref<64x256xf32, #tpu.memory_space<vmem>>, vector<8x128xf32>
    %155 = vector.extract_strided_slice %147 {offsets = [0, 0], sizes = [8, 128], strides = [1, 1]} : vector<8x256xf32> to vector<8x128xf32>
    %156 = arith.addf %154, %155 : vector<8x128xf32>
    %157 = arith.index_cast %152 : i32 to index
    %c128_40 = arith.constant 128 : index
    %158 = vector.load %arg10[%157, %c128_40] : memref<64x256xf32, #tpu.memory_space<vmem>>, vector<8x128xf32>
    %159 = vector.extract_strided_slice %147 {offsets = [0, 128], sizes = [8, 128], strides = [1, 1]} : vector<8x256xf32> to vector<8x128xf32>
    %160 = arith.addf %158, %159 : vector<8x128xf32>
    %161 = vector.extract_strided_slice %156 {offsets = [0, 0], sizes = [8, 96], strides = [1, 1]} : vector<8x128xf32> to vector<8x96xf32>
    %162 = arith.negf %161 : vector<8x96xf32>
    %163 = math.exp %162 : vector<8x96xf32>
    %cst_41 = arith.constant 1.000000e+00 : f32
    %164 = vector.broadcast %cst_41 : f32 to vector<8x96xf32>
    %165 = arith.addf %164, %163 : vector<8x96xf32>
    %166 = arith.divf %164, %165 : vector<8x96xf32>
    %167 = vector.extract_strided_slice %160 {offsets = [0, 0], sizes = [8, 96], strides = [1, 1]} : vector<8x128xf32> to vector<8x96xf32>
    %168 = arith.negf %167 : vector<8x96xf32>
    %169 = math.exp %168 : vector<8x96xf32>
    %cst_42 = arith.constant 1.000000e+00 : f32
    %170 = vector.broadcast %cst_42 : f32 to vector<8x96xf32>
    %171 = arith.addf %170, %169 : vector<8x96xf32>
    %172 = arith.divf %170, %171 : vector<8x96xf32>
    %173 = vector.extract_strided_slice %166 {offsets = [0, 32], sizes = [8, 32], strides = [1, 1]} : vector<8x96xf32> to vector<8x32xf32>
    %174 = arith.mulf %173, %127 : vector<8x32xf32>
    %175 = vector.extract_strided_slice %166 {offsets = [0, 0], sizes = [8, 32], strides = [1, 1]} : vector<8x96xf32> to vector<8x32xf32>
    %176 = vector.extract_strided_slice %156 {offsets = [0, 96], sizes = [8, 32], strides = [1, 1]} : vector<8x128xf32> to vector<8x32xf32>
    %177 = math.tanh %176 : vector<8x32xf32>
    %178 = arith.mulf %175, %177 : vector<8x32xf32>
    %179 = arith.addf %174, %178 : vector<8x32xf32>
    %180 = vector.extract_strided_slice %172 {offsets = [0, 32], sizes = [8, 32], strides = [1, 1]} : vector<8x96xf32> to vector<8x32xf32>
    %181 = arith.mulf %180, %134 : vector<8x32xf32>
    %182 = vector.extract_strided_slice %172 {offsets = [0, 0], sizes = [8, 32], strides = [1, 1]} : vector<8x96xf32> to vector<8x32xf32>
    %183 = vector.extract_strided_slice %160 {offsets = [0, 96], sizes = [8, 32], strides = [1, 1]} : vector<8x128xf32> to vector<8x32xf32>
    %184 = math.tanh %183 : vector<8x32xf32>
    %185 = arith.mulf %182, %184 : vector<8x32xf32>
    %186 = arith.addf %181, %185 : vector<8x32xf32>
    %187 = vector.extract_strided_slice %166 {offsets = [0, 64], sizes = [8, 32], strides = [1, 1]} : vector<8x96xf32> to vector<8x32xf32>
    %188 = math.tanh %179 : vector<8x32xf32>
    %189 = arith.mulf %187, %188 : vector<8x32xf32>
    %190 = vector.extract_strided_slice %172 {offsets = [0, 64], sizes = [8, 32], strides = [1, 1]} : vector<8x96xf32> to vector<8x32xf32>
    %191 = math.tanh %186 : vector<8x32xf32>
    %192 = arith.mulf %190, %191 : vector<8x32xf32>
    %193 = arith.index_cast %149 : i32 to index
    %c0_43 = arith.constant 0 : index
    %194 = vector.load %arg11[%193, %c0_43] : memref<64x64xf32, #tpu.memory_space<vmem>>, vector<8x32xf32>
    tpu.vector_store %arg11[%193, %c0_43], %189 {strides = array<i32>} : memref<64x64xf32, #tpu.memory_space<vmem>>, vector<8x32xf32>,
    %195 = arith.index_cast %152 : i32 to index
    %c32_44 = arith.constant 32 : index
    %196 = vector.load %arg11[%195, %c32_44] : memref<64x64xf32, #tpu.memory_space<vmem>>, vector<8x32xf32>
    tpu.vector_store %arg11[%195, %c32_44], %192 {strides = array<i32>} : memref<64x64xf32, #tpu.memory_space<vmem>>, vector<8x32xf32>,
    %197 = tpu.concatenate %189, %192 in 1 : vector<8x32xf32>, vector<8x32xf32> -> vector<8x64xf32>
    %198 = arith.truncf %197 : vector<8x64xf32> to vector<8x64xbf16>
    %c3_i32 = arith.constant 3 : i32
    %cst_45 = arith.constant dense<0.000000e+00> : vector<8x256xf32>
    %199 = tpu.matmul %198, %40, %cst_45 {dimension_numbers = #tpu.dot_dimension_numbers<[1], [0], [0], [1], [0, 0, 1, 1], [], []>} : vector<8x64xbf16>, vector<64x256xbf16>, vector<8x256xf32> -> vector<8x256xf32>
    %c8_i32_46 = arith.constant 8 : i32
    %200 = arith.muli %c3_i32, %c8_i32_46 : i32
    %201 = tpu.assume_multiple %200, 8 : i32
    %c7_i32_47 = arith.constant 7 : i32
    %202 = arith.subi %c7_i32_47, %c3_i32 : i32
    %c8_i32_48 = arith.constant 8 : i32
    %203 = arith.muli %202, %c8_i32_48 : i32
    %204 = tpu.assume_multiple %203, 8 : i32
    %205 = arith.index_cast %201 : i32 to index
    %c0_49 = arith.constant 0 : index
    %206 = vector.load %arg10[%205, %c0_49] : memref<64x256xf32, #tpu.memory_space<vmem>>, vector<8x128xf32>
    %207 = vector.extract_strided_slice %199 {offsets = [0, 0], sizes = [8, 128], strides = [1, 1]} : vector<8x256xf32> to vector<8x128xf32>
    %208 = arith.addf %206, %207 : vector<8x128xf32>
    %209 = arith.index_cast %204 : i32 to index
    %c128_50 = arith.constant 128 : index
    %210 = vector.load %arg10[%209, %c128_50] : memref<64x256xf32, #tpu.memory_space<vmem>>, vector<8x128xf32>
    %211 = vector.extract_strided_slice %199 {offsets = [0, 128], sizes = [8, 128], strides = [1, 1]} : vector<8x256xf32> to vector<8x128xf32>
    %212 = arith.addf %210, %211 : vector<8x128xf32>
    %213 = vector.extract_strided_slice %208 {offsets = [0, 0], sizes = [8, 96], strides = [1, 1]} : vector<8x128xf32> to vector<8x96xf32>
    %214 = arith.negf %213 : vector<8x96xf32>
    %215 = math.exp %214 : vector<8x96xf32>
    %cst_51 = arith.constant 1.000000e+00 : f32
    %216 = vector.broadcast %cst_51 : f32 to vector<8x96xf32>
    %217 = arith.addf %216, %215 : vector<8x96xf32>
    %218 = arith.divf %216, %217 : vector<8x96xf32>
    %219 = vector.extract_strided_slice %212 {offsets = [0, 0], sizes = [8, 96], strides = [1, 1]} : vector<8x128xf32> to vector<8x96xf32>
    %220 = arith.negf %219 : vector<8x96xf32>
    %221 = math.exp %220 : vector<8x96xf32>
    %cst_52 = arith.constant 1.000000e+00 : f32
    %222 = vector.broadcast %cst_52 : f32 to vector<8x96xf32>
    %223 = arith.addf %222, %221 : vector<8x96xf32>
    %224 = arith.divf %222, %223 : vector<8x96xf32>
    %225 = vector.extract_strided_slice %218 {offsets = [0, 32], sizes = [8, 32], strides = [1, 1]} : vector<8x96xf32> to vector<8x32xf32>
    %226 = arith.mulf %225, %179 : vector<8x32xf32>
    %227 = vector.extract_strided_slice %218 {offsets = [0, 0], sizes = [8, 32], strides = [1, 1]} : vector<8x96xf32> to vector<8x32xf32>
    %228 = vector.extract_strided_slice %208 {offsets = [0, 96], sizes = [8, 32], strides = [1, 1]} : vector<8x128xf32> to vector<8x32xf32>
    %229 = math.tanh %228 : vector<8x32xf32>
    %230 = arith.mulf %227, %229 : vector<8x32xf32>
    %231 = arith.addf %226, %230 : vector<8x32xf32>
    %232 = vector.extract_strided_slice %224 {offsets = [0, 32], sizes = [8, 32], strides = [1, 1]} : vector<8x96xf32> to vector<8x32xf32>
    %233 = arith.mulf %232, %186 : vector<8x32xf32>
    %234 = vector.extract_strided_slice %224 {offsets = [0, 0], sizes = [8, 32], strides = [1, 1]} : vector<8x96xf32> to vector<8x32xf32>
    %235 = vector.extract_strided_slice %212 {offsets = [0, 96], sizes = [8, 32], strides = [1, 1]} : vector<8x128xf32> to vector<8x32xf32>
    %236 = math.tanh %235 : vector<8x32xf32>
    %237 = arith.mulf %234, %236 : vector<8x32xf32>
    %238 = arith.addf %233, %237 : vector<8x32xf32>
    %239 = vector.extract_strided_slice %218 {offsets = [0, 64], sizes = [8, 32], strides = [1, 1]} : vector<8x96xf32> to vector<8x32xf32>
    %240 = math.tanh %231 : vector<8x32xf32>
    %241 = arith.mulf %239, %240 : vector<8x32xf32>
    %242 = vector.extract_strided_slice %224 {offsets = [0, 64], sizes = [8, 32], strides = [1, 1]} : vector<8x96xf32> to vector<8x32xf32>
    %243 = math.tanh %238 : vector<8x32xf32>
    %244 = arith.mulf %242, %243 : vector<8x32xf32>
    %245 = arith.index_cast %201 : i32 to index
    %c0_53 = arith.constant 0 : index
    %246 = vector.load %arg11[%245, %c0_53] : memref<64x64xf32, #tpu.memory_space<vmem>>, vector<8x32xf32>
    tpu.vector_store %arg11[%245, %c0_53], %241 {strides = array<i32>} : memref<64x64xf32, #tpu.memory_space<vmem>>, vector<8x32xf32>,
    %247 = arith.index_cast %204 : i32 to index
    %c32_54 = arith.constant 32 : index
    %248 = vector.load %arg11[%247, %c32_54] : memref<64x64xf32, #tpu.memory_space<vmem>>, vector<8x32xf32>
    tpu.vector_store %arg11[%247, %c32_54], %244 {strides = array<i32>} : memref<64x64xf32, #tpu.memory_space<vmem>>, vector<8x32xf32>,
    %249 = tpu.concatenate %241, %244 in 1 : vector<8x32xf32>, vector<8x32xf32> -> vector<8x64xf32>
    %250 = arith.truncf %249 : vector<8x64xf32> to vector<8x64xbf16>
    %c4_i32 = arith.constant 4 : i32
    %cst_55 = arith.constant dense<0.000000e+00> : vector<8x256xf32>
    %251 = tpu.matmul %250, %40, %cst_55 {dimension_numbers = #tpu.dot_dimension_numbers<[1], [0], [0], [1], [0, 0, 1, 1], [], []>} : vector<8x64xbf16>, vector<64x256xbf16>, vector<8x256xf32> -> vector<8x256xf32>
    %c8_i32_56 = arith.constant 8 : i32
    %252 = arith.muli %c4_i32, %c8_i32_56 : i32
    %253 = tpu.assume_multiple %252, 8 : i32
    %c7_i32_57 = arith.constant 7 : i32
    %254 = arith.subi %c7_i32_57, %c4_i32 : i32
    %c8_i32_58 = arith.constant 8 : i32
    %255 = arith.muli %254, %c8_i32_58 : i32
    %256 = tpu.assume_multiple %255, 8 : i32
    %257 = arith.index_cast %253 : i32 to index
    %c0_59 = arith.constant 0 : index
    %258 = vector.load %arg10[%257, %c0_59] : memref<64x256xf32, #tpu.memory_space<vmem>>, vector<8x128xf32>
    %259 = vector.extract_strided_slice %251 {offsets = [0, 0], sizes = [8, 128], strides = [1, 1]} : vector<8x256xf32> to vector<8x128xf32>
    %260 = arith.addf %258, %259 : vector<8x128xf32>
    %261 = arith.index_cast %256 : i32 to index
    %c128_60 = arith.constant 128 : index
    %262 = vector.load %arg10[%261, %c128_60] : memref<64x256xf32, #tpu.memory_space<vmem>>, vector<8x128xf32>
    %263 = vector.extract_strided_slice %251 {offsets = [0, 128], sizes = [8, 128], strides = [1, 1]} : vector<8x256xf32> to vector<8x128xf32>
    %264 = arith.addf %262, %263 : vector<8x128xf32>
    %265 = vector.extract_strided_slice %260 {offsets = [0, 0], sizes = [8, 96], strides = [1, 1]} : vector<8x128xf32> to vector<8x96xf32>
    %266 = arith.negf %265 : vector<8x96xf32>
    %267 = math.exp %266 : vector<8x96xf32>
    %cst_61 = arith.constant 1.000000e+00 : f32
    %268 = vector.broadcast %cst_61 : f32 to vector<8x96xf32>
    %269 = arith.addf %268, %267 : vector<8x96xf32>
    %270 = arith.divf %268, %269 : vector<8x96xf32>
    %271 = vector.extract_strided_slice %264 {offsets = [0, 0], sizes = [8, 96], strides = [1, 1]} : vector<8x128xf32> to vector<8x96xf32>
    %272 = arith.negf %271 : vector<8x96xf32>
    %273 = math.exp %272 : vector<8x96xf32>
    %cst_62 = arith.constant 1.000000e+00 : f32
    %274 = vector.broadcast %cst_62 : f32 to vector<8x96xf32>
    %275 = arith.addf %274, %273 : vector<8x96xf32>
    %276 = arith.divf %274, %275 : vector<8x96xf32>
    %277 = vector.extract_strided_slice %270 {offsets = [0, 32], sizes = [8, 32], strides = [1, 1]} : vector<8x96xf32> to vector<8x32xf32>
    %278 = arith.mulf %277, %231 : vector<8x32xf32>
    %279 = vector.extract_strided_slice %270 {offsets = [0, 0], sizes = [8, 32], strides = [1, 1]} : vector<8x96xf32> to vector<8x32xf32>
    %280 = vector.extract_strided_slice %260 {offsets = [0, 96], sizes = [8, 32], strides = [1, 1]} : vector<8x128xf32> to vector<8x32xf32>
    %281 = math.tanh %280 : vector<8x32xf32>
    %282 = arith.mulf %279, %281 : vector<8x32xf32>
    %283 = arith.addf %278, %282 : vector<8x32xf32>
    %284 = vector.extract_strided_slice %276 {offsets = [0, 32], sizes = [8, 32], strides = [1, 1]} : vector<8x96xf32> to vector<8x32xf32>
    %285 = arith.mulf %284, %238 : vector<8x32xf32>
    %286 = vector.extract_strided_slice %276 {offsets = [0, 0], sizes = [8, 32], strides = [1, 1]} : vector<8x96xf32> to vector<8x32xf32>
    %287 = vector.extract_strided_slice %264 {offsets = [0, 96], sizes = [8, 32], strides = [1, 1]} : vector<8x128xf32> to vector<8x32xf32>
    %288 = math.tanh %287 : vector<8x32xf32>
    %289 = arith.mulf %286, %288 : vector<8x32xf32>
    %290 = arith.addf %285, %289 : vector<8x32xf32>
    %291 = vector.extract_strided_slice %270 {offsets = [0, 64], sizes = [8, 32], strides = [1, 1]} : vector<8x96xf32> to vector<8x32xf32>
    %292 = math.tanh %283 : vector<8x32xf32>
    %293 = arith.mulf %291, %292 : vector<8x32xf32>
    %294 = vector.extract_strided_slice %276 {offsets = [0, 64], sizes = [8, 32], strides = [1, 1]} : vector<8x96xf32> to vector<8x32xf32>
    %295 = math.tanh %290 : vector<8x32xf32>
    %296 = arith.mulf %294, %295 : vector<8x32xf32>
    %297 = arith.index_cast %253 : i32 to index
    %c0_63 = arith.constant 0 : index
    %298 = vector.load %arg11[%297, %c0_63] : memref<64x64xf32, #tpu.memory_space<vmem>>, vector<8x32xf32>
    tpu.vector_store %arg11[%297, %c0_63], %293 {strides = array<i32>} : memref<64x64xf32, #tpu.memory_space<vmem>>, vector<8x32xf32>,
    %299 = arith.index_cast %256 : i32 to index
    %c32_64 = arith.constant 32 : index
    %300 = vector.load %arg11[%299, %c32_64] : memref<64x64xf32, #tpu.memory_space<vmem>>, vector<8x32xf32>
    tpu.vector_store %arg11[%299, %c32_64], %296 {strides = array<i32>} : memref<64x64xf32, #tpu.memory_space<vmem>>, vector<8x32xf32>,
    %301 = tpu.concatenate %293, %296 in 1 : vector<8x32xf32>, vector<8x32xf32> -> vector<8x64xf32>
    %302 = arith.truncf %301 : vector<8x64xf32> to vector<8x64xbf16>
    %c5_i32 = arith.constant 5 : i32
    %cst_65 = arith.constant dense<0.000000e+00> : vector<8x256xf32>
    %303 = tpu.matmul %302, %40, %cst_65 {dimension_numbers = #tpu.dot_dimension_numbers<[1], [0], [0], [1], [0, 0, 1, 1], [], []>} : vector<8x64xbf16>, vector<64x256xbf16>, vector<8x256xf32> -> vector<8x256xf32>
    %c8_i32_66 = arith.constant 8 : i32
    %304 = arith.muli %c5_i32, %c8_i32_66 : i32
    %305 = tpu.assume_multiple %304, 8 : i32
    %c7_i32_67 = arith.constant 7 : i32
    %306 = arith.subi %c7_i32_67, %c5_i32 : i32
    %c8_i32_68 = arith.constant 8 : i32
    %307 = arith.muli %306, %c8_i32_68 : i32
    %308 = tpu.assume_multiple %307, 8 : i32
    %309 = arith.index_cast %305 : i32 to index
    %c0_69 = arith.constant 0 : index
    %310 = vector.load %arg10[%309, %c0_69] : memref<64x256xf32, #tpu.memory_space<vmem>>, vector<8x128xf32>
    %311 = vector.extract_strided_slice %303 {offsets = [0, 0], sizes = [8, 128], strides = [1, 1]} : vector<8x256xf32> to vector<8x128xf32>
    %312 = arith.addf %310, %311 : vector<8x128xf32>
    %313 = arith.index_cast %308 : i32 to index
    %c128_70 = arith.constant 128 : index
    %314 = vector.load %arg10[%313, %c128_70] : memref<64x256xf32, #tpu.memory_space<vmem>>, vector<8x128xf32>
    %315 = vector.extract_strided_slice %303 {offsets = [0, 128], sizes = [8, 128], strides = [1, 1]} : vector<8x256xf32> to vector<8x128xf32>
    %316 = arith.addf %314, %315 : vector<8x128xf32>
    %317 = vector.extract_strided_slice %312 {offsets = [0, 0], sizes = [8, 96], strides = [1, 1]} : vector<8x128xf32> to vector<8x96xf32>
    %318 = arith.negf %317 : vector<8x96xf32>
    %319 = math.exp %318 : vector<8x96xf32>
    %cst_71 = arith.constant 1.000000e+00 : f32
    %320 = vector.broadcast %cst_71 : f32 to vector<8x96xf32>
    %321 = arith.addf %320, %319 : vector<8x96xf32>
    %322 = arith.divf %320, %321 : vector<8x96xf32>
    %323 = vector.extract_strided_slice %316 {offsets = [0, 0], sizes = [8, 96], strides = [1, 1]} : vector<8x128xf32> to vector<8x96xf32>
    %324 = arith.negf %323 : vector<8x96xf32>
    %325 = math.exp %324 : vector<8x96xf32>
    %cst_72 = arith.constant 1.000000e+00 : f32
    %326 = vector.broadcast %cst_72 : f32 to vector<8x96xf32>
    %327 = arith.addf %326, %325 : vector<8x96xf32>
    %328 = arith.divf %326, %327 : vector<8x96xf32>
    %329 = vector.extract_strided_slice %322 {offsets = [0, 32], sizes = [8, 32], strides = [1, 1]} : vector<8x96xf32> to vector<8x32xf32>
    %330 = arith.mulf %329, %283 : vector<8x32xf32>
    %331 = vector.extract_strided_slice %322 {offsets = [0, 0], sizes = [8, 32], strides = [1, 1]} : vector<8x96xf32> to vector<8x32xf32>
    %332 = vector.extract_strided_slice %312 {offsets = [0, 96], sizes = [8, 32], strides = [1, 1]} : vector<8x128xf32> to vector<8x32xf32>
    %333 = math.tanh %332 : vector<8x32xf32>
    %334 = arith.mulf %331, %333 : vector<8x32xf32>
    %335 = arith.addf %330, %334 : vector<8x32xf32>
    %336 = vector.extract_strided_slice %328 {offsets = [0, 32], sizes = [8, 32], strides = [1, 1]} : vector<8x96xf32> to vector<8x32xf32>
    %337 = arith.mulf %336, %290 : vector<8x32xf32>
    %338 = vector.extract_strided_slice %328 {offsets = [0, 0], sizes = [8, 32], strides = [1, 1]} : vector<8x96xf32> to vector<8x32xf32>
    %339 = vector.extract_strided_slice %316 {offsets = [0, 96], sizes = [8, 32], strides = [1, 1]} : vector<8x128xf32> to vector<8x32xf32>
    %340 = math.tanh %339 : vector<8x32xf32>
    %341 = arith.mulf %338, %340 : vector<8x32xf32>
    %342 = arith.addf %337, %341 : vector<8x32xf32>
    %343 = vector.extract_strided_slice %322 {offsets = [0, 64], sizes = [8, 32], strides = [1, 1]} : vector<8x96xf32> to vector<8x32xf32>
    %344 = math.tanh %335 : vector<8x32xf32>
    %345 = arith.mulf %343, %344 : vector<8x32xf32>
    %346 = vector.extract_strided_slice %328 {offsets = [0, 64], sizes = [8, 32], strides = [1, 1]} : vector<8x96xf32> to vector<8x32xf32>
    %347 = math.tanh %342 : vector<8x32xf32>
    %348 = arith.mulf %346, %347 : vector<8x32xf32>
    %349 = arith.index_cast %305 : i32 to index
    %c0_73 = arith.constant 0 : index
    %350 = vector.load %arg11[%349, %c0_73] : memref<64x64xf32, #tpu.memory_space<vmem>>, vector<8x32xf32>
    tpu.vector_store %arg11[%349, %c0_73], %345 {strides = array<i32>} : memref<64x64xf32, #tpu.memory_space<vmem>>, vector<8x32xf32>,
    %351 = arith.index_cast %308 : i32 to index
    %c32_74 = arith.constant 32 : index
    %352 = vector.load %arg11[%351, %c32_74] : memref<64x64xf32, #tpu.memory_space<vmem>>, vector<8x32xf32>
    tpu.vector_store %arg11[%351, %c32_74], %348 {strides = array<i32>} : memref<64x64xf32, #tpu.memory_space<vmem>>, vector<8x32xf32>,
    %353 = tpu.concatenate %345, %348 in 1 : vector<8x32xf32>, vector<8x32xf32> -> vector<8x64xf32>
    %354 = arith.truncf %353 : vector<8x64xf32> to vector<8x64xbf16>
    %c6_i32 = arith.constant 6 : i32
    %cst_75 = arith.constant dense<0.000000e+00> : vector<8x256xf32>
    %355 = tpu.matmul %354, %40, %cst_75 {dimension_numbers = #tpu.dot_dimension_numbers<[1], [0], [0], [1], [0, 0, 1, 1], [], []>} : vector<8x64xbf16>, vector<64x256xbf16>, vector<8x256xf32> -> vector<8x256xf32>
    %c8_i32_76 = arith.constant 8 : i32
    %356 = arith.muli %c6_i32, %c8_i32_76 : i32
    %357 = tpu.assume_multiple %356, 8 : i32
    %c7_i32_77 = arith.constant 7 : i32
    %358 = arith.subi %c7_i32_77, %c6_i32 : i32
    %c8_i32_78 = arith.constant 8 : i32
    %359 = arith.muli %358, %c8_i32_78 : i32
    %360 = tpu.assume_multiple %359, 8 : i32
    %361 = arith.index_cast %357 : i32 to index
    %c0_79 = arith.constant 0 : index
    %362 = vector.load %arg10[%361, %c0_79] : memref<64x256xf32, #tpu.memory_space<vmem>>, vector<8x128xf32>
    %363 = vector.extract_strided_slice %355 {offsets = [0, 0], sizes = [8, 128], strides = [1, 1]} : vector<8x256xf32> to vector<8x128xf32>
    %364 = arith.addf %362, %363 : vector<8x128xf32>
    %365 = arith.index_cast %360 : i32 to index
    %c128_80 = arith.constant 128 : index
    %366 = vector.load %arg10[%365, %c128_80] : memref<64x256xf32, #tpu.memory_space<vmem>>, vector<8x128xf32>
    %367 = vector.extract_strided_slice %355 {offsets = [0, 128], sizes = [8, 128], strides = [1, 1]} : vector<8x256xf32> to vector<8x128xf32>
    %368 = arith.addf %366, %367 : vector<8x128xf32>
    %369 = vector.extract_strided_slice %364 {offsets = [0, 0], sizes = [8, 96], strides = [1, 1]} : vector<8x128xf32> to vector<8x96xf32>
    %370 = arith.negf %369 : vector<8x96xf32>
    %371 = math.exp %370 : vector<8x96xf32>
    %cst_81 = arith.constant 1.000000e+00 : f32
    %372 = vector.broadcast %cst_81 : f32 to vector<8x96xf32>
    %373 = arith.addf %372, %371 : vector<8x96xf32>
    %374 = arith.divf %372, %373 : vector<8x96xf32>
    %375 = vector.extract_strided_slice %368 {offsets = [0, 0], sizes = [8, 96], strides = [1, 1]} : vector<8x128xf32> to vector<8x96xf32>
    %376 = arith.negf %375 : vector<8x96xf32>
    %377 = math.exp %376 : vector<8x96xf32>
    %cst_82 = arith.constant 1.000000e+00 : f32
    %378 = vector.broadcast %cst_82 : f32 to vector<8x96xf32>
    %379 = arith.addf %378, %377 : vector<8x96xf32>
    %380 = arith.divf %378, %379 : vector<8x96xf32>
    %381 = vector.extract_strided_slice %374 {offsets = [0, 32], sizes = [8, 32], strides = [1, 1]} : vector<8x96xf32> to vector<8x32xf32>
    %382 = arith.mulf %381, %335 : vector<8x32xf32>
    %383 = vector.extract_strided_slice %374 {offsets = [0, 0], sizes = [8, 32], strides = [1, 1]} : vector<8x96xf32> to vector<8x32xf32>
    %384 = vector.extract_strided_slice %364 {offsets = [0, 96], sizes = [8, 32], strides = [1, 1]} : vector<8x128xf32> to vector<8x32xf32>
    %385 = math.tanh %384 : vector<8x32xf32>
    %386 = arith.mulf %383, %385 : vector<8x32xf32>
    %387 = arith.addf %382, %386 : vector<8x32xf32>
    %388 = vector.extract_strided_slice %380 {offsets = [0, 32], sizes = [8, 32], strides = [1, 1]} : vector<8x96xf32> to vector<8x32xf32>
    %389 = arith.mulf %388, %342 : vector<8x32xf32>
    %390 = vector.extract_strided_slice %380 {offsets = [0, 0], sizes = [8, 32], strides = [1, 1]} : vector<8x96xf32> to vector<8x32xf32>
    %391 = vector.extract_strided_slice %368 {offsets = [0, 96], sizes = [8, 32], strides = [1, 1]} : vector<8x128xf32> to vector<8x32xf32>
    %392 = math.tanh %391 : vector<8x32xf32>
    %393 = arith.mulf %390, %392 : vector<8x32xf32>
    %394 = arith.addf %389, %393 : vector<8x32xf32>
    %395 = vector.extract_strided_slice %374 {offsets = [0, 64], sizes = [8, 32], strides = [1, 1]} : vector<8x96xf32> to vector<8x32xf32>
    %396 = math.tanh %387 : vector<8x32xf32>
    %397 = arith.mulf %395, %396 : vector<8x32xf32>
    %398 = vector.extract_strided_slice %380 {offsets = [0, 64], sizes = [8, 32], strides = [1, 1]} : vector<8x96xf32> to vector<8x32xf32>
    %399 = math.tanh %394 : vector<8x32xf32>
    %400 = arith.mulf %398, %399 : vector<8x32xf32>
    %401 = arith.index_cast %357 : i32 to index
    %c0_83 = arith.constant 0 : index
    %402 = vector.load %arg11[%401, %c0_83] : memref<64x64xf32, #tpu.memory_space<vmem>>, vector<8x32xf32>
    tpu.vector_store %arg11[%401, %c0_83], %397 {strides = array<i32>} : memref<64x64xf32, #tpu.memory_space<vmem>>, vector<8x32xf32>,
    %403 = arith.index_cast %360 : i32 to index
    %c32_84 = arith.constant 32 : index
    %404 = vector.load %arg11[%403, %c32_84] : memref<64x64xf32, #tpu.memory_space<vmem>>, vector<8x32xf32>
    tpu.vector_store %arg11[%403, %c32_84], %400 {strides = array<i32>} : memref<64x64xf32, #tpu.memory_space<vmem>>, vector<8x32xf32>,
    %405 = tpu.concatenate %397, %400 in 1 : vector<8x32xf32>, vector<8x32xf32> -> vector<8x64xf32>
    %406 = arith.truncf %405 : vector<8x64xf32> to vector<8x64xbf16>
    %c7_i32_85 = arith.constant 7 : i32
    %cst_86 = arith.constant dense<0.000000e+00> : vector<8x256xf32>
    %407 = tpu.matmul %406, %40, %cst_86 {dimension_numbers = #tpu.dot_dimension_numbers<[1], [0], [0], [1], [0, 0, 1, 1], [], []>} : vector<8x64xbf16>, vector<64x256xbf16>, vector<8x256xf32> -> vector<8x256xf32>
    %c8_i32_87 = arith.constant 8 : i32
    %408 = arith.muli %c7_i32_85, %c8_i32_87 : i32
    %409 = tpu.assume_multiple %408, 8 : i32
    %c7_i32_88 = arith.constant 7 : i32
    %410 = arith.subi %c7_i32_88, %c7_i32_85 : i32
    %c8_i32_89 = arith.constant 8 : i32
    %411 = arith.muli %410, %c8_i32_89 : i32
    %412 = tpu.assume_multiple %411, 8 : i32
    %413 = arith.index_cast %409 : i32 to index
    %c0_90 = arith.constant 0 : index
    %414 = vector.load %arg10[%413, %c0_90] : memref<64x256xf32, #tpu.memory_space<vmem>>, vector<8x128xf32>
    %415 = vector.extract_strided_slice %407 {offsets = [0, 0], sizes = [8, 128], strides = [1, 1]} : vector<8x256xf32> to vector<8x128xf32>
    %416 = arith.addf %414, %415 : vector<8x128xf32>
    %417 = arith.index_cast %412 : i32 to index
    %c128_91 = arith.constant 128 : index
    %418 = vector.load %arg10[%417, %c128_91] : memref<64x256xf32, #tpu.memory_space<vmem>>, vector<8x128xf32>
    %419 = vector.extract_strided_slice %407 {offsets = [0, 128], sizes = [8, 128], strides = [1, 1]} : vector<8x256xf32> to vector<8x128xf32>
    %420 = arith.addf %418, %419 : vector<8x128xf32>
    %421 = vector.extract_strided_slice %416 {offsets = [0, 0], sizes = [8, 96], strides = [1, 1]} : vector<8x128xf32> to vector<8x96xf32>
    %422 = arith.negf %421 : vector<8x96xf32>
    %423 = math.exp %422 : vector<8x96xf32>
    %cst_92 = arith.constant 1.000000e+00 : f32
    %424 = vector.broadcast %cst_92 : f32 to vector<8x96xf32>
    %425 = arith.addf %424, %423 : vector<8x96xf32>
    %426 = arith.divf %424, %425 : vector<8x96xf32>
    %427 = vector.extract_strided_slice %420 {offsets = [0, 0], sizes = [8, 96], strides = [1, 1]} : vector<8x128xf32> to vector<8x96xf32>
    %428 = arith.negf %427 : vector<8x96xf32>
    %429 = math.exp %428 : vector<8x96xf32>
    %cst_93 = arith.constant 1.000000e+00 : f32
    %430 = vector.broadcast %cst_93 : f32 to vector<8x96xf32>
    %431 = arith.addf %430, %429 : vector<8x96xf32>
    %432 = arith.divf %430, %431 : vector<8x96xf32>
    %433 = vector.extract_strided_slice %426 {offsets = [0, 32], sizes = [8, 32], strides = [1, 1]} : vector<8x96xf32> to vector<8x32xf32>
    %434 = arith.mulf %433, %387 : vector<8x32xf32>
    %435 = vector.extract_strided_slice %426 {offsets = [0, 0], sizes = [8, 32], strides = [1, 1]} : vector<8x96xf32> to vector<8x32xf32>
    %436 = vector.extract_strided_slice %416 {offsets = [0, 96], sizes = [8, 32], strides = [1, 1]} : vector<8x128xf32> to vector<8x32xf32>
    %437 = math.tanh %436 : vector<8x32xf32>
    %438 = arith.mulf %435, %437 : vector<8x32xf32>
    %439 = arith.addf %434, %438 : vector<8x32xf32>
    %440 = vector.extract_strided_slice %432 {offsets = [0, 32], sizes = [8, 32], strides = [1, 1]} : vector<8x96xf32> to vector<8x32xf32>
    %441 = arith.mulf %440, %394 : vector<8x32xf32>
    %442 = vector.extract_strided_slice %432 {offsets = [0, 0], sizes = [8, 32], strides = [1, 1]} : vector<8x96xf32> to vector<8x32xf32>
    %443 = vector.extract_strided_slice %420 {offsets = [0, 96], sizes = [8, 32], strides = [1, 1]} : vector<8x128xf32> to vector<8x32xf32>
    %444 = math.tanh %443 : vector<8x32xf32>
    %445 = arith.mulf %442, %444 : vector<8x32xf32>
    %446 = arith.addf %441, %445 : vector<8x32xf32>
    %447 = vector.extract_strided_slice %426 {offsets = [0, 64], sizes = [8, 32], strides = [1, 1]} : vector<8x96xf32> to vector<8x32xf32>
    %448 = math.tanh %439 : vector<8x32xf32>
    %449 = arith.mulf %447, %448 : vector<8x32xf32>
    %450 = vector.extract_strided_slice %432 {offsets = [0, 64], sizes = [8, 32], strides = [1, 1]} : vector<8x96xf32> to vector<8x32xf32>
    %451 = math.tanh %446 : vector<8x32xf32>
    %452 = arith.mulf %450, %451 : vector<8x32xf32>
    %453 = arith.index_cast %409 : i32 to index
    %c0_94 = arith.constant 0 : index
    %454 = vector.load %arg11[%453, %c0_94] : memref<64x64xf32, #tpu.memory_space<vmem>>, vector<8x32xf32>
    tpu.vector_store %arg11[%453, %c0_94], %449 {strides = array<i32>} : memref<64x64xf32, #tpu.memory_space<vmem>>, vector<8x32xf32>,
    %455 = arith.index_cast %412 : i32 to index
    %c32_95 = arith.constant 32 : index
    %456 = vector.load %arg11[%455, %c32_95] : memref<64x64xf32, #tpu.memory_space<vmem>>, vector<8x32xf32>
    tpu.vector_store %arg11[%455, %c32_95], %452 {strides = array<i32>} : memref<64x64xf32, #tpu.memory_space<vmem>>, vector<8x32xf32>,
    %457 = tpu.concatenate %449, %452 in 1 : vector<8x32xf32>, vector<8x32xf32> -> vector<8x64xf32>
    %458 = arith.truncf %457 : vector<8x64xf32> to vector<8x64xbf16>
    %c8_i32_96 = arith.constant 8 : i32
    %c0_97 = arith.constant 0 : index
    %c0_98 = arith.constant 0 : index
    %459 = vector.load %arg11[%c0_97, %c0_98] : memref<64x64xf32, #tpu.memory_space<vmem>>, vector<64x64xf32>
    %460 = arith.truncf %459 : vector<64x64xf32> to vector<64x64xbf16>
    %c0_99 = arith.constant 0 : index
    %c0_100 = arith.constant 0 : index
    %461 = vector.load %arg7[%c0_99, %c0_100] : memref<64x128xbf16, #tpu.memory_space<vmem>>, vector<64x128xbf16>
    %cst_101 = arith.constant dense<0.000000e+00> : vector<64x128xf32>
    %462 = tpu.matmul %460, %461, %cst_101 {dimension_numbers = #tpu.dot_dimension_numbers<[1], [0], [0], [1], [0, 0, 1, 1], [], []>} : vector<64x64xbf16>, vector<64x128xbf16>, vector<64x128xf32> -> vector<64x128xf32>
    %c0_102 = arith.constant 0 : index
    %c0_103 = arith.constant 0 : index
    %463 = vector.load %arg8[%c0_102, %c0_103] : memref<1x128xf32, #tpu.memory_space<vmem>>, vector<1x128xf32>
    %464 = vector.broadcast %463 : vector<1x128xf32> to vector<64x128xf32>
    %465 = arith.addf %462, %464 : vector<64x128xf32>
    %cst_104 = arith.constant dense<0xFF800000> : vector<64xf32>
    %466 = vector.multi_reduction <maximumf>, %465, %cst_104 [1] : vector<64x128xf32> to vector<64xf32>
    %467 = vector.shape_cast %466 : vector<64xf32> to vector<64x1xf32>
    %468 = vector.broadcast %467 : vector<64x1xf32> to vector<64x128xf32>
    %469 = arith.subf %465, %468 : vector<64x128xf32>
    %470 = math.exp %469 : vector<64x128xf32>
    %cst_105 = arith.constant dense<0.000000e+00> : vector<64xf32>
    %471 = vector.multi_reduction <add>, %470, %cst_105 [1] : vector<64x128xf32> to vector<64xf32>
    %472 = vector.shape_cast %471 : vector<64xf32> to vector<64x1xf32>
    %473 = math.log %472 : vector<64x1xf32>
    %474 = vector.broadcast %473 : vector<64x1xf32> to vector<64x128xf32>
    %475 = arith.subf %469, %474 : vector<64x128xf32>
    %c0_106 = arith.constant 0 : index
    %c0_107 = arith.constant 0 : index
    %476 = vector.load %arg9[%c0_106, %c0_107] : memref<64x128xf32, #tpu.memory_space<vmem>>, vector<64x128xf32>
    tpu.vector_store %arg9[%c0_106, %c0_107], %475 {strides = array<i32>} : memref<64x128xf32, #tpu.memory_space<vmem>>, vector<64x128xf32>,
    return
  }
}

</mosaic_0001>

<llo_original>
// kernel: final_model_forward.1
$region0: #{final_model_forward.1}
  #allocation0 [shape = 'u32[]', space=smem, size = 0x4, offset = 0x4, fixed_abs, tag = 'smem constant byte address 0x4 - core index']
  #allocation1 [shape = 'u32[144,128]{1,0:T(1,128)}', space=vmem, size = 0x12000, scoped, tag = 'internal scratch']
  #allocation2 [shape = 'f32[64,256]{1,0:T(8,128)}', space=vmem, size = 0x10000, scoped, tag = 'scratch operand']
  #allocation3 [shape = 'f32[64,64]{1,0:T(8,128)}', space=vmem, size = 0x8000, scoped, tag = 'scratch operand']
  %s0 = inlined_call_operand.vmem [shape: bf16[64,112], index: 0, kind: input, shape index: {}]
  %s1 = inlined_call_operand.vmem [shape: bf16[112,96], index: 1, kind: input, shape index: {}]
  %s2 = inlined_call_operand.vmem [shape: f32[1,8], index: 2, kind: input, shape index: {}]
  %s3 = inlined_call_operand.vmem [shape: f32[64,16], index: 3, kind: input, shape index: {}]
  %s4 = inlined_call_operand.vmem [shape: bf16[24,256], index: 4, kind: input, shape index: {}]
  %s5 = inlined_call_operand.vmem [shape: f32[1,256], index: 5, kind: input, shape index: {}]
  %s6 = inlined_call_operand.vmem [shape: bf16[64,256], index: 6, kind: input, shape index: {}]
  %s7 = inlined_call_operand.vmem [shape: bf16[64,128], index: 7, kind: input, shape index: {}]
  %s8 = inlined_call_operand.vmem [shape: f32[1,128], index: 8, kind: input, shape index: {}]
  %s9 = inlined_call_operand.vmem [shape: f32[64,128], index: 9, kind: output, shape index: {}]
  %s10 = sld [smem:[#allocation0]]
  $region46: #{final_model_forward.1} parent=0
    _
  %s12 = ssub.s32 1, %s10
  %s13 = scalar_select 0, %s12, %s10
  // Predicated region
  $region2: #{final_model_forward.1} parent=0 // pred_check
    _
  $region3: #{final_model_forward.1} parent=0 // pred_check_branch
    %15 = sbr.rel (0) target = $region5
  $region4: #{final_model_forward.1} parent=0 // pred_region
    _
  $region5: #{final_model_forward.1} parent=0 // pred_fallthru
    _
  // Predicated region
  $region6: #{final_model_forward.1} parent=0 // pred_check
    _
  $region7: #{final_model_forward.1} parent=0 // pred_check_branch
    %17 = sbr.rel (0) target = $region9
  $region8: #{final_model_forward.1} parent=0 // pred_region
    _
  $region9: #{final_model_forward.1} parent=0 // pred_fallthru
    _
  // Predicated region
  $region10: #{final_model_forward.1} parent=0 // pred_check
    _
  $region11: #{final_model_forward.1} parent=0 // pred_check_branch
    %19 = sbr.rel (0) target = $region13
  $region12: #{final_model_forward.1} parent=0 // pred_region
    _
  $region13: #{final_model_forward.1} parent=0 // pred_fallthru
    _
  // Predicated region
  $region14: #{final_model_forward.1} parent=0 // pred_check
    _
  $region15: #{final_model_forward.1} parent=0 // pred_check_branch
    %21 = sbr.rel (0) target = $region17
  $region16: #{final_model_forward.1} parent=0 // pred_region
    _
  $region17: #{final_model_forward.1} parent=0 // pred_fallthru
    _
  // Predicated region
  $region18: #{final_model_forward.1} parent=0 // pred_check
    _
  $region19: #{final_model_forward.1} parent=0 // pred_check_branch
    %23 = sbr.rel (0) target = $region21
  $region20: #{final_model_forward.1} parent=0 // pred_region
    _
  $region21: #{final_model_forward.1} parent=0 // pred_fallthru
    _
  // Predicated region
  $region22: #{final_model_forward.1} parent=0 // pred_check
    _
  $region23: #{final_model_forward.1} parent=0 // pred_check_branch
    %25 = sbr.rel (0) target = $region25
  $region24: #{final_model_forward.1} parent=0 // pred_region
    _
  $region25: #{final_model_forward.1} parent=0 // pred_fallthru
    _
  // Predicated region
  $region26: #{final_model_forward.1} parent=0 // pred_check
    _
  $region27: #{final_model_forward.1} parent=0 // pred_check_branch
    %27 = sbr.rel (0) target = $region29
  $region28: #{final_model_forward.1} parent=0 // pred_region
    _
  $region29: #{final_model_forward.1} parent=0 // pred_fallthru
    _
  // Predicated region
  $region30: #{final_model_forward.1} parent=0 // pred_check
    _
  $region31: #{final_model_forward.1} parent=0 // pred_check_branch
    %29 = sbr.rel (0) target = $region33
  $region32: #{final_model_forward.1} parent=0 // pred_region
    _
  $region33: #{final_model_forward.1} parent=0 // pred_fallthru
    _
  // Predicated region
  $region34: #{final_model_forward.1} parent=0 // pred_check
    _
  $region35: #{final_model_forward.1} parent=0 // pred_check_branch
    %31 = sbr.rel (0) target = $region37
  $region36: #{final_model_forward.1} parent=0 // pred_region
    _
  $region37: #{final_model_forward.1} parent=0 // pred_fallthru
    _
  %v33 = vld [vmem:[%s0] sm:$0xf]
  %v34 = vld [vmem:[%s0 + $0x4] sm:$0xf]
  %v35 = vld [vmem:[%s0 + $0x8] sm:$0xf]
  %v36 = vld [vmem:[%s0 + $0xc] sm:$0xf]
  %v37 = vld [vmem:[%s0 + $0x10] sm:$0xf]
  %v38 = vld [vmem:[%s0 + $0x14] sm:$0xf]
  %v39 = vld [vmem:[%s0 + $0x18] sm:$0xf]
  %v40 = vld [vmem:[%s0 + $0x1c] sm:$0xf]
  %v41 = vld [vmem:[%s1] sm:$0xf]
  %v42 = vld [vmem:[%s1 + $0x4] sm:$0xf]
  %v43 = vld [vmem:[%s1 + $0x8] sm:$0xf]
  %v44 = vld [vmem:[%s1 + $0xc] sm:$0xf]
  %v45 = vld [vmem:[%s1 + $0x10] sm:$0xf]
  %v46 = vld [vmem:[%s1 + $0x14] sm:$0xf]
  %v47 = vld [vmem:[%s1 + $0x18] sm:$0xf]
  %v48 = vld [vmem:[%s1 + $0x1c] sm:$0xf]
  %v49 = vld [vmem:[%s1 + $0x20] sm:$0xf]
  %v50 = vld [vmem:[%s1 + $0x24] sm:$0xf]
  %v51 = vld [vmem:[%s1 + $0x28] sm:$0xf]
  %v52 = vld [vmem:[%s1 + $0x2c] sm:$0xf]
  %v53 = vld [vmem:[%s1 + $0x30] sm:$0xf]
  %v54 = vld [vmem:[%s1 + $0x34] sm:$0xf]
  %v63 = vunpack.c.l.b16 %v33
  %v64 = vunpack.c.l.b16 %v34
  %v65 = vunpack.c.l.b16 %v35
  %v66 = vunpack.c.l.b16 %v36
  %v67 = vunpack.c.l.b16 %v37
  %v68 = vunpack.c.l.b16 %v38
  %v69 = vunpack.c.l.b16 %v39
  %v70 = vunpack.c.l.b16 %v40
  %v71 = vpack.c.b16 %v64, %v63
  %v72 = vpack.c.b16 %v66, %v65
  %v73 = vpack.c.b16 %v68, %v67
  %v74 = vpack.c.b16 %v70, %v69
  %v89 = vunpack.c.l.b16 %v41
  %v90 = vunpack.c.l.b16 %v42
  %v91 = vunpack.c.l.b16 %v43
  %v92 = vunpack.c.l.b16 %v44
  %v93 = vunpack.c.l.b16 %v45
  %v94 = vunpack.c.l.b16 %v46
  %v95 = vunpack.c.l.b16 %v47
  %v96 = vunpack.c.l.b16 %v48
  %v97 = vunpack.c.l.b16 %v49
  %v98 = vunpack.c.l.b16 %v50
  %v99 = vunpack.c.l.b16 %v51
  %v100 = vunpack.c.l.b16 %v52
  %v101 = vunpack.c.l.b16 %v53
  %v102 = vunpack.c.l.b16 %v54
  %v103 = vpack.c.b16 %v90, %v89
  %v104 = vpack.c.b16 %v92, %v91
  %v105 = vpack.c.b16 %v94, %v93
  %v106 = vpack.c.b16 %v96, %v95
  %v107 = vpack.c.b16 %v98, %v97
  %v108 = vpack.c.b16 %v100, %v99
  %v109 = vpack.c.b16 %v102, %v101
  %vm117 = vcmask 916480
  %v119 = vsel %vm117, %v71, 0
  %v122 = vsel %vm117, %v72, 0
  %v125 = vsel %vm117, %v73, 0
  %v128 = vsel %vm117, %v74, 0
  %130 = vmatprep.subr.bf16.mxu0 0
  %131 = vmatpush1.bf16.msra.mxu0 %v103
  %132 = vmatprep.subr.bf16.mxu0 0
  %133 = vmatpush1.bf16.msra.mxu0 %v104
  %134 = vmatprep.subr.bf16.mxu0 0
  %135 = vmatpush1.bf16.msra.mxu0 %v105
  %136 = vmatprep.subr.bf16.mxu0 0
  %137 = vmatpush1.bf16.msra.mxu0 %v106
  %138 = vmatprep.subr.bf16.mxu0 0
  %139 = vmatpush1.bf16.msra.mxu0 %v107
  %140 = vmatprep.subr.bf16.mxu0 0
  %141 = vmatpush1.bf16.msra.mxu0 %v108
  %142 = vmatprep.subr.bf16.mxu0 0
  %143 = vmatpush1.bf16.msra.mxu0 %v109
  %144 = vmatprep.subr.bf16.mxu0 0
  %145 = vmatpush1.bf16.msra.mxu0 0
  %146 = vmatprep.subr.bf16.mxu0 0
  %147 = vmatpush1.bf16.msra.mxu0 0
  %148 = vmatprep.subr.bf16.mxu0 0
  %149 = vmatpush1.bf16.msra.mxu0 0
  %150 = vmatprep.subr.bf16.mxu0 0
  %151 = vmatpush1.bf16.msra.mxu0 0
  %152 = vmatprep.subr.bf16.mxu0 0
  %153 = vmatpush1.bf16.msra.mxu0 0
  %154 = vmatprep.subr.bf16.mxu0 0
  %155 = vmatpush1.bf16.msra.mxu0 0
  %156 = vmatprep.subr.bf16.mxu0 0
  %157 = vmatpush1.bf16.msra.mxu0 0
  %158 = vmatprep.subr.bf16.mxu0 0
  %159 = vmatpush1.bf16.msra.mxu0 0
  %160 = vmatprep.subr.bf16.mxu0 0
  %161 = vmatpush1.bf16.msra.mxu0 0
  %162 = vmatprep.mubr.bf16.mxu0 0
  %163 = vmatmul.mubr.bf16.gmra.mrb[0].mxu0 %v119
  %v164 = vpop.f32.mrb[0].mxu0
  %v165 = vadd.f32 0.0, %v164
  %v166 = vpop.f32.mrb[0].mxu0
  %v167 = vpop.f32.mrb[0].mxu0
  %v168 = vadd.f32 0.0, %v167
  %v169 = vpop.f32.mrb[0].mxu0
  %170 = vmatprep.mubr.bf16.mxu0 0
  %171 = vmatmul.mubr.bf16.gmra.mrb[0].mxu0 %v122
  %v172 = vpop.f32.mrb[0].mxu0
  %v173 = vadd.f32 0.0, %v172
  %v174 = vpop.f32.mrb[0].mxu0
  %v175 = vpop.f32.mrb[0].mxu0
  %v176 = vadd.f32 0.0, %v175
  %v177 = vpop.f32.mrb[0].mxu0
  %178 = vmatprep.mubr.bf16.mxu0 0
  %179 = vmatmul.mubr.bf16.gmra.mrb[0].mxu0 %v125
  %v180 = vpop.f32.mrb[0].mxu0
  %v181 = vadd.f32 0.0, %v180
  %v182 = vpop.f32.mrb[0].mxu0
  %v183 = vpop.f32.mrb[0].mxu0
  %v184 = vadd.f32 0.0, %v183
  %v185 = vpop.f32.mrb[0].mxu0
  %186 = vmatprep.mubr.bf16.mxu0 0
  %187 = vmatmul.mubr.bf16.gmra.mrb[0].mxu0 %v128
  %v188 = vpop.f32.mrb[0].mxu0
  %v189 = vadd.f32 0.0, %v188
  %v190 = vpop.f32.mrb[0].mxu0
  %v191 = vpop.f32.mrb[0].mxu0
  %v192 = vadd.f32 0.0, %v191
  %v193 = vpop.f32.mrb[0].mxu0
  %194 = vdwg.mxu0
  %203 = vrot.lane.b32.xlu0 %v165, 120
  %v204 = vpop.permute.xlu0 %203
  %205 = vrot.lane.b32.xlu0 %v168, 120
  %v206 = vpop.permute.xlu0 %205
  %207 = vrot.lane.b32.xlu0 %v173, 120
  %v208 = vpop.permute.xlu0 %207
  %209 = vrot.lane.b32.xlu0 %v176, 120
  %v210 = vpop.permute.xlu0 %209
  %211 = vrot.lane.b32.xlu0 %v181, 120
  %v212 = vpop.permute.xlu0 %211
  %213 = vrot.lane.b32.xlu0 %v184, 120
  %v214 = vpop.permute.xlu0 %213
  %215 = vrot.lane.b32.xlu0 %v189, 120
  %v216 = vpop.permute.xlu0 %215
  %217 = vrot.lane.b32.xlu0 %v192, 120
  %v218 = vpop.permute.xlu0 %217
  %v227 = vmax.f32 %v165, %v204
  %v228 = vmax.f32 %v168, %v206
  %v229 = vmax.f32 %v173, %v208
  %v230 = vmax.f32 %v176, %v210
  %v231 = vmax.f32 %v181, %v212
  %v232 = vmax.f32 %v184, %v214
  %v233 = vmax.f32 %v189, %v216
  %v234 = vmax.f32 %v192, %v218
  %243 = vrot.lane.b32.xlu0 %v227, 112
  %v244 = vpop.permute.xlu0 %243
  %245 = vrot.lane.b32.xlu0 %v228, 112
  %v246 = vpop.permute.xlu0 %245
  %247 = vrot.lane.b32.xlu0 %v229, 112
  %v248 = vpop.permute.xlu0 %247
  %249 = vrot.lane.b32.xlu0 %v230, 112
  %v250 = vpop.permute.xlu0 %249
  %251 = vrot.lane.b32.xlu0 %v231, 112
  %v252 = vpop.permute.xlu0 %251
  %253 = vrot.lane.b32.xlu0 %v232, 112
  %v254 = vpop.permute.xlu0 %253
  %255 = vrot.lane.b32.xlu0 %v233, 112
  %v256 = vpop.permute.xlu0 %255
  %257 = vrot.lane.b32.xlu0 %v234, 112
  %v258 = vpop.permute.xlu0 %257
  %v267 = vmax.f32 %v227, %v244
  %v268 = vmax.f32 %v228, %v246
  %v269 = vmax.f32 %v229, %v248
  %v270 = vmax.f32 %v230, %v250
  %v271 = vmax.f32 %v231, %v252
  %v272 = vmax.f32 %v232, %v254
  %v273 = vmax.f32 %v233, %v256
  %v274 = vmax.f32 %v234, %v258
  %283 = vrot.lane.b32.xlu0 %v267, 96
  %v284 = vpop.permute.xlu0 %283
  %285 = vrot.lane.b32.xlu0 %v268, 96
  %v286 = vpop.permute.xlu0 %285
  %287 = vrot.lane.b32.xlu0 %v269, 96
  %v288 = vpop.permute.xlu0 %287
  %289 = vrot.lane.b32.xlu0 %v270, 96
  %v290 = vpop.permute.xlu0 %289
  %291 = vrot.lane.b32.xlu0 %v271, 96
  %v292 = vpop.permute.xlu0 %291
  %293 = vrot.lane.b32.xlu0 %v272, 96
  %v294 = vpop.permute.xlu0 %293
  %295 = vrot.lane.b32.xlu0 %v273, 96
  %v296 = vpop.permute.xlu0 %295
  %297 = vrot.lane.b32.xlu0 %v274, 96
  %v298 = vpop.permute.xlu0 %297
  %v307 = vmax.f32 %v267, %v284
  %v308 = vmax.f32 %v268, %v286
  %v309 = vmax.f32 %v269, %v288
  %v310 = vmax.f32 %v270, %v290
  %v311 = vmax.f32 %v271, %v292
  %v312 = vmax.f32 %v272, %v294
  %v313 = vmax.f32 %v273, %v296
  %v314 = vmax.f32 %v274, %v298
  %315 = vrot.lane.b32.xlu0 %v267, 64
  %v316 = vpop.permute.xlu0 %315
  %317 = vrot.lane.b32.xlu0 %v268, 64
  %v318 = vpop.permute.xlu0 %317
  %319 = vrot.lane.b32.xlu0 %v269, 64
  %v320 = vpop.permute.xlu0 %319
  %321 = vrot.lane.b32.xlu0 %v270, 64
  %v322 = vpop.permute.xlu0 %321
  %323 = vrot.lane.b32.xlu0 %v271, 64
  %v324 = vpop.permute.xlu0 %323
  %325 = vrot.lane.b32.xlu0 %v272, 64
  %v326 = vpop.permute.xlu0 %325
  %327 = vrot.lane.b32.xlu0 %v273, 64
  %v328 = vpop.permute.xlu0 %327
  %329 = vrot.lane.b32.xlu0 %v274, 64
  %v330 = vpop.permute.xlu0 %329
  %v339 = vmax.f32 %v307, %v316
  %v340 = vmax.f32 %v308, %v318
  %v341 = vmax.f32 %v309, %v320
  %v342 = vmax.f32 %v310, %v322
  %v343 = vmax.f32 %v311, %v324
  %v344 = vmax.f32 %v312, %v326
  %v345 = vmax.f32 %v313, %v328
  %v346 = vmax.f32 %v314, %v330
  %v347 = vld [vmem:[%s2] sm:$0x1]
  %v349 = vlaneseq
  %v350 = vshrl.u32 %v349, 7
  %v351 = vsub.s32 0, %v350
  %v352 = vrot.slane %v347, %v351
  %v354 = vadd.f32 %v339, %v352
  %v355 = vadd.f32 %v340, %v352
  %v356 = vadd.f32 %v341, %v352
  %v357 = vadd.f32 %v342, %v352
  %v358 = vadd.f32 %v343, %v352
  %v359 = vadd.f32 %v344, %v352
  %v360 = vadd.f32 %v345, %v352
  %v361 = vadd.f32 %v346, %v352
  %v362 = vmax.f32 %v354, 0.0
  %v363 = vmax.f32 %v355, 0.0
  %v364 = vmax.f32 %v356, 0.0
  %v365 = vmax.f32 %v357, 0.0
  %v366 = vmax.f32 %v358, 0.0
  %v367 = vmax.f32 %v359, 0.0
  %v368 = vmax.f32 %v360, 0.0
  %v369 = vmax.f32 %v361, 0.0
  %v370 = vld [vmem:[%s3] sm:$0xff]
  %v371 = vld [vmem:[%s3 + $0x8] sm:$0xff]
  %v372 = vld [vmem:[%s3 + $0x10] sm:$0xff]
  %v373 = vld [vmem:[%s3 + $0x18] sm:$0xff]
  %v374 = vld [vmem:[%s3 + $0x20] sm:$0xff]
  %v375 = vld [vmem:[%s3 + $0x28] sm:$0xff]
  %v376 = vld [vmem:[%s3 + $0x30] sm:$0xff]
  %v377 = vld [vmem:[%s3 + $0x38] sm:$0xff]
  %386 = vrot.lane.b32.xlu0 %v362, 16
  %v387 = vpop.permute.xlu0 %386
  %388 = vrot.lane.b32.xlu0 %v363, 16
  %v389 = vpop.permute.xlu0 %388
  %390 = vrot.lane.b32.xlu0 %v364, 16
  %v391 = vpop.permute.xlu0 %390
  %392 = vrot.lane.b32.xlu0 %v365, 16
  %v393 = vpop.permute.xlu0 %392
  %394 = vrot.lane.b32.xlu0 %v366, 16
  %v395 = vpop.permute.xlu0 %394
  %396 = vrot.lane.b32.xlu0 %v367, 16
  %v397 = vpop.permute.xlu0 %396
  %398 = vrot.lane.b32.xlu0 %v368, 16
  %v399 = vpop.permute.xlu0 %398
  %400 = vrot.lane.b32.xlu0 %v369, 16
  %v401 = vpop.permute.xlu0 %400
  %vm410 = vcmask 130048
  %v411 = vsel %vm410, %v370, %v387
  %v412 = vsel %vm410, %v371, %v389
  %v413 = vsel %vm410, %v372, %v391
  %v414 = vsel %vm410, %v373, %v393
  %v415 = vsel %vm410, %v374, %v395
  %v416 = vsel %vm410, %v375, %v397
  %v417 = vsel %vm410, %v376, %v399
  %v418 = vsel %vm410, %v377, %v401
  %v419 = vpack.c.bf16 %v412, %v411
  %v420 = vpack.c.bf16 %v414, %v413
  %v421 = vpack.c.bf16 %v416, %v415
  %v422 = vpack.c.bf16 %v418, %v417
  %v423 = vld [vmem:[%s4] sm:$0xff]
  %v424 = vld [vmem:[%s4 + $0x8] sm:$0xff]
  %v425 = vld [vmem:[%s4 + $0x10] sm:$0xff]
  %v426 = vld [vmem:[%s5] sm:$0x3]
  %v428 = vlaneseq
  %v429 = vshrl.u32 %v428, 7
  %v430 = vsub.s32 0, %v429
  %v431 = vrot.slane %v426, %v430
  %v432 = vlaneseq
  %v433 = vshrl.u32 %v432, 7
  %v434 = vsub.s32 1, %v433
  %v435 = vrot.slane %v426, %v434
  %v441 = vunpack.c.l.b16 %v423
  %v442 = vunpack.c.h.b16 %v423
  %v443 = vunpack.c.l.b16 %v424
  %v444 = vunpack.c.h.b16 %v424
  %v445 = vunpack.c.l.b16 %v425
  %v446 = vunpack.c.h.b16 %v425
  %v447 = vpack.c.b16 %v443, %v441
  %v448 = vpack.c.b16 %v444, %v442
  %v449 = vpack.c.b16 %v445, %v445
  %v450 = vpack.c.b16 %v446, %v446
  %vm453 = vcmask 195584
  %v455 = vsel %vm453, %v419, 0
  %v458 = vsel %vm453, %v420, 0
  %v461 = vsel %vm453, %v421, 0
  %v464 = vsel %vm453, %v422, 0
  %vm466 = vcmask 1043456
  %v468 = vsel %vm466, %v449, 0
  %v471 = vsel %vm466, %v450, 0
  %473 = vmatprep.subr.bf16.mxu0 %v448
  %474 = vmatpush1.bf16.msra.mxu0 %v447
  %475 = vmatprep.subr.bf16.mxu0 %v471
  %476 = vmatpush1.bf16.msra.mxu0 %v468
  %477 = vmatprep.subr.bf16.mxu0 0
  %478 = vmatpush1.bf16.msra.mxu0 0
  %479 = vmatprep.subr.bf16.mxu0 0
  %480 = vmatpush1.bf16.msra.mxu0 0
  %481 = vmatprep.subr.bf16.mxu0 0
  %482 = vmatpush1.bf16.msra.mxu0 0
  %483 = vmatprep.subr.bf16.mxu0 0
  %484 = vmatpush1.bf16.msra.mxu0 0
  %485 = vmatprep.subr.bf16.mxu0 0
  %486 = vmatpush1.bf16.msra.mxu0 0
  %487 = vmatprep.subr.bf16.mxu0 0
  %488 = vmatpush1.bf16.msra.mxu0 0
  %489 = vmatprep.subr.bf16.mxu0 0
  %490 = vmatpush1.bf16.msra.mxu0 0
  %491 = vmatprep.subr.bf16.mxu0 0
  %492 = vmatpush1.bf16.msra.mxu0 0
  %493 = vmatprep.subr.bf16.mxu0 0
  %494 = vmatpush1.bf16.msra.mxu0 0
  %495 = vmatprep.subr.bf16.mxu0 0
  %496 = vmatpush1.bf16.msra.mxu0 0
  %497 = vmatprep.subr.bf16.mxu0 0
  %498 = vmatpush1.bf16.msra.mxu0 0
  %499 = vmatprep.subr.bf16.mxu0 0
  %500 = vmatpush1.bf16.msra.mxu0 0
  %501 = vmatprep.subr.bf16.mxu0 0
  %502 = vmatpush1.bf16.msra.mxu0 0
  %503 = vmatprep.subr.bf16.mxu0 0
  %504 = vmatpush1.bf16.msra.mxu0 0
  %505 = vmatprep.mubr.bf16.mxu0 0
  %506 = vmatmul.mubr.bf16.gmra.mrb[0].mxu0 %v455
  %v507 = vpop.f32.mrb[0].mxu0
  %v508 = vadd.f32 %v431, %v507
  %v509 = vpop.f32.mrb[0].mxu0
  %v510 = vadd.f32 %v435, %v509
  %v511 = vpop.f32.mrb[0].mxu0
  %v512 = vadd.f32 %v431, %v511
  %v513 = vpop.f32.mrb[0].mxu0
  %v514 = vadd.f32 %v435, %v513
  %515 = vmatprep.mubr.bf16.mxu0 0
  %516 = vmatmul.mubr.bf16.gmra.mrb[0].mxu0 %v458
  %v517 = vpop.f32.mrb[0].mxu0
  %v518 = vadd.f32 %v431, %v517
  %v519 = vpop.f32.mrb[0].mxu0
  %v520 = vadd.f32 %v435, %v519
  %v521 = vpop.f32.mrb[0].mxu0
  %v522 = vadd.f32 %v431, %v521
  %v523 = vpop.f32.mrb[0].mxu0
  %v524 = vadd.f32 %v435, %v523
  %525 = vmatprep.mubr.bf16.mxu0 0
  %526 = vmatmul.mubr.bf16.gmra.mrb[0].mxu0 %v461
  %v527 = vpop.f32.mrb[0].mxu0
  %v528 = vadd.f32 %v431, %v527
  %v529 = vpop.f32.mrb[0].mxu0
  %v530 = vadd.f32 %v435, %v529
  %v531 = vpop.f32.mrb[0].mxu0
  %v532 = vadd.f32 %v431, %v531
  %v533 = vpop.f32.mrb[0].mxu0
  %v534 = vadd.f32 %v435, %v533
  %535 = vmatprep.mubr.bf16.mxu0 0
  %536 = vmatmul.mubr.bf16.gmra.mrb[0].mxu0 %v464
  %v537 = vpop.f32.mrb[0].mxu0
  %v538 = vadd.f32 %v431, %v537
  %v539 = vpop.f32.mrb[0].mxu0
  %v540 = vadd.f32 %v435, %v539
  %v541 = vpop.f32.mrb[0].mxu0
  %v542 = vadd.f32 %v431, %v541
  %v543 = vpop.f32.mrb[0].mxu0
  %v544 = vadd.f32 %v435, %v543
  %545 = vdwg.mxu0
  %546 = vst [vmem:[#allocation2] sm:$0xff] %v508
  %547 = vst [vmem:[#allocation2 + $0x8] sm:$0xff] %v510
  %548 = vst [vmem:[#allocation2 + $0x10] sm:$0xff] %v512
  %549 = vst [vmem:[#allocation2 + $0x18] sm:$0xff] %v514
  %550 = vst [vmem:[#allocation2 + $0x20] sm:$0xff] %v518
  %551 = vst [vmem:[#allocation2 + $0x28] sm:$0xff] %v520
  %552 = vst [vmem:[#allocation2 + $0x30] sm:$0xff] %v522
  %553 = vst [vmem:[#allocation2 + $0x38] sm:$0xff] %v524
  %554 = vst [vmem:[#allocation2 + $0x40] sm:$0xff] %v528
  %555 = vst [vmem:[#allocation2 + $0x48] sm:$0xff] %v530
  %556 = vst [vmem:[#allocation2 + $0x50] sm:$0xff] %v532
  %557 = vst [vmem:[#allocation2 + $0x58] sm:$0xff] %v534
  %558 = vst [vmem:[#allocation2 + $0x60] sm:$0xff] %v538
  %559 = vst [vmem:[#allocation2 + $0x68] sm:$0xff] %v540
  %560 = vst [vmem:[#allocation2 + $0x70] sm:$0xff] %v542
  %561 = vst [vmem:[#allocation2 + $0x78] sm:$0xff] %v544
  %v562 = vld [vmem:[%s6] sm:$0xff]
  %v563 = vld [vmem:[%s6 + $0x8] sm:$0xff]
  %v564 = vld [vmem:[%s6 + $0x10] sm:$0xff]
  %v565 = vld [vmem:[%s6 + $0x18] sm:$0xff]
  %v566 = vld [vmem:[%s6 + $0x20] sm:$0xff]
  %v567 = vld [vmem:[%s6 + $0x28] sm:$0xff]
  %v568 = vld [vmem:[%s6 + $0x30] sm:$0xff]
  %v569 = vld [vmem:[%s6 + $0x38] sm:$0xff]
  %v578 = vunpack.c.l.b16 %v562
  %v579 = vunpack.c.h.b16 %v562
  %v580 = vunpack.c.l.b16 %v563
  %v581 = vunpack.c.h.b16 %v563
  %v582 = vunpack.c.l.b16 %v564
  %v583 = vunpack.c.h.b16 %v564
  %v584 = vunpack.c.l.b16 %v565
  %v585 = vunpack.c.h.b16 %v565
  %v586 = vunpack.c.l.b16 %v566
  %v587 = vunpack.c.h.b16 %v566
  %v588 = vunpack.c.l.b16 %v567
  %v589 = vunpack.c.h.b16 %v567
  %v590 = vunpack.c.l.b16 %v568
  %v591 = vunpack.c.h.b16 %v568
  %v592 = vunpack.c.l.b16 %v569
  %v593 = vunpack.c.h.b16 %v569
  %v594 = vpack.c.b16 %v580, %v578
  %v595 = vpack.c.b16 %v581, %v579
  %v596 = vpack.c.b16 %v584, %v582
  %v597 = vpack.c.b16 %v585, %v583
  %v598 = vpack.c.b16 %v588, %v586
  %v599 = vpack.c.b16 %v589, %v587
  %v600 = vpack.c.b16 %v592, %v590
  %v601 = vpack.c.b16 %v593, %v591
  %vm610 = vcmask 523264
  %v612 = vsel %vm610, 0, 0
  %614 = vmatprep.subr.bf16.mxu0 %v595
  %615 = vmatpush1.bf16.msra.mxu0 %v594
  %616 = vmatprep.subr.bf16.mxu0 %v597
  %617 = vmatpush1.bf16.msra.mxu0 %v596
  %618 = vmatprep.subr.bf16.mxu0 %v599
  %619 = vmatpush1.bf16.msra.mxu0 %v598
  %620 = vmatprep.subr.bf16.mxu0 %v601
  %621 = vmatpush1.bf16.msra.mxu0 %v600
  %622 = vmatprep.subr.bf16.mxu0 0
  %623 = vmatpush1.bf16.msra.mxu0 0
  %624 = vmatprep.subr.bf16.mxu0 0
  %625 = vmatpush1.bf16.msra.mxu0 0
  %626 = vmatprep.subr.bf16.mxu0 0
  %627 = vmatpush1.bf16.msra.mxu0 0
  %628 = vmatprep.subr.bf16.mxu0 0
  %629 = vmatpush1.bf16.msra.mxu0 0
  %630 = vmatprep.subr.bf16.mxu0 0
  %631 = vmatpush1.bf16.msra.mxu0 0
  %632 = vmatprep.subr.bf16.mxu0 0
  %633 = vmatpush1.bf16.msra.mxu0 0
  %634 = vmatprep.subr.bf16.mxu0 0
  %635 = vmatpush1.bf16.msra.mxu0 0
  %636 = vmatprep.subr.bf16.mxu0 0
  %637 = vmatpush1.bf16.msra.mxu0 0
  %638 = vmatprep.subr.bf16.mxu0 0
  %639 = vmatpush1.bf16.msra.mxu0 0
  %640 = vmatprep.subr.bf16.mxu0 0
  %641 = vmatpush1.bf16.msra.mxu0 0
  %642 = vmatprep.subr.bf16.mxu0 0
  %643 = vmatpush1.bf16.msra.mxu0 0
  %644 = vmatprep.subr.bf16.mxu0 0
  %645 = vmatpush1.bf16.msra.mxu0 0
  %646 = vmatprep.mubr.bf16.mxu0 0
  %647 = vmatmul.mubr.bf16.gmra.mrb[0].mxu0 %v612
  %v648 = vpop.f32.mrb[0].mxu0
  %v649 = vadd.f32 0.0, %v648
  %v650 = vpop.f32.mrb[0].mxu0
  %v651 = vadd.f32 0.0, %v650
  %v652 = vpop.f32.mrb[0].mxu0
  %v653 = vpop.f32.mrb[0].mxu0
  %654 = vdwg.mxu0
  %s655 = smul.u32 0, 2
  %s656 = smul.addr %s655, 8
  %s657 = scalar_lea.vmem [#allocation2], %s656
  %v658 = vld [vmem:[%s657] sm:$0xff]
  %v659 = vadd.f32 %v658, %v649
  %s660 = smul.u32 7, 2
  %s661 = smul.addr %s660, 8
  %s662 = scalar_lea.vmem [#allocation2], %s661
  %v663 = vld [vmem:[%s662 + $0x8] sm:$0xff]
  %v664 = vadd.f32 %v663, %v651
  %v665 = vxor.u32 %v659, 2147483648
  %v666 = vmul.f32 %v665, 1.442695
  %v667 = vpow.pop %v666
  %v668 = vadd.f32 %v667, 1.0
  %v669 = vrcp.pop %v668
  %v670 = vmul.f32 1.0, %v669
  %v671 = vxor.u32 %v664, 2147483648
  %v672 = vmul.f32 %v671, 1.442695
  %v673 = vpow.pop %v672
  %v674 = vadd.f32 %v673, 1.0
  %v675 = vrcp.pop %v674
  %v676 = vmul.f32 1.0, %v675
  %v677 = vmul.f32 %v670, 0.0
  %v678 = vtanh.pop %v659
  %680 = vrot.lane.b32.xlu0 %v678, 32
  %v681 = vpop.permute.xlu0 %680
  %v683 = vmul.f32 %v670, %v681
  %685 = vrot.lane.b32.xlu0 %v683, 32
  %v686 = vpop.permute.xlu0 %685
  %v688 = vadd.f32 %v677, %v686
  %v689 = vmul.f32 %v676, 0.0
  %v690 = vtanh.pop %v664
  %692 = vrot.lane.b32.xlu0 %v690, 32
  %v693 = vpop.permute.xlu0 %692
  %v695 = vmul.f32 %v676, %v693
  %697 = vrot.lane.b32.xlu0 %v695, 32
  %v698 = vpop.permute.xlu0 %697
  %v700 = vadd.f32 %v689, %v698
  %v701 = vtanh.pop %v688
  %703 = vrot.lane.b32.xlu0 %v701, 32
  %v704 = vpop.permute.xlu0 %703
  %v706 = vmul.f32 %v670, %v704
  %v707 = vtanh.pop %v700
  %709 = vrot.lane.b32.xlu0 %v707, 32
  %v710 = vpop.permute.xlu0 %709
  %v712 = vmul.f32 %v676, %v710
  %714 = vrot.lane.b32.xlu0 %v706, 64
  %v715 = vpop.permute.xlu0 %714
  %vm717 = vcmask 261120
  %718 = vst.msk [vmem:[#allocation3] sm:$0xff] %vm717, %v715
  %720 = vrot.lane.b32.xlu0 %v712, 96
  %v721 = vpop.permute.xlu0 %720
  %s723 = scalar_lea.vmem [#allocation3], 56
  %vm724 = vcmask 523520
  %725 = vst.msk [vmem:[%s723] sm:$0xff] %vm724, %v721
  %v726 = vsel %vm717, %v715, %v721
  %v727 = vpack.c.bf16 %v726, %v726
  %v729 = vsel %vm610, %v727, 0
  %731 = vmatprep.subr.bf16.mxu0 %v595
  %732 = vmatpush1.bf16.msra.mxu0 %v594
  %733 = vmatprep.subr.bf16.mxu0 %v597
  %734 = vmatpush1.bf16.msra.mxu0 %v596
  %735 = vmatprep.subr.bf16.mxu0 %v599
  %736 = vmatpush1.bf16.msra.mxu0 %v598
  %737 = vmatprep.subr.bf16.mxu0 %v601
  %738 = vmatpush1.bf16.msra.mxu0 %v600
  %739 = vmatprep.subr.bf16.mxu0 0
  %740 = vmatpush1.bf16.msra.mxu0 0
  %741 = vmatprep.subr.bf16.mxu0 0
  %742 = vmatpush1.bf16.msra.mxu0 0
  %743 = vmatprep.subr.bf16.mxu0 0
  %744 = vmatpush1.bf16.msra.mxu0 0
  %745 = vmatprep.subr.bf16.mxu0 0
  %746 = vmatpush1.bf16.msra.mxu0 0
  %747 = vmatprep.subr.bf16.mxu0 0
  %748 = vmatpush1.bf16.msra.mxu0 0
  %749 = vmatprep.subr.bf16.mxu0 0
  %750 = vmatpush1.bf16.msra.mxu0 0
  %751 = vmatprep.subr.bf16.mxu0 0
  %752 = vmatpush1.bf16.msra.mxu0 0
  %753 = vmatprep.subr.bf16.mxu0 0
  %754 = vmatpush1.bf16.msra.mxu0 0
  %755 = vmatprep.subr.bf16.mxu0 0
  %756 = vmatpush1.bf16.msra.mxu0 0
  %757 = vmatprep.subr.bf16.mxu0 0
  %758 = vmatpush1.bf16.msra.mxu0 0
  %759 = vmatprep.subr.bf16.mxu0 0
  %760 = vmatpush1.bf16.msra.mxu0 0
  %761 = vmatprep.subr.bf16.mxu0 0
  %762 = vmatpush1.bf16.msra.mxu0 0
  %763 = vmatprep.mubr.bf16.mxu0 0
  %764 = vmatmul.mubr.bf16.gmra.mrb[0].mxu0 %v729
  %v765 = vpop.f32.mrb[0].mxu0
  %v766 = vadd.f32 0.0, %v765
  %v767 = vpop.f32.mrb[0].mxu0
  %v768 = vadd.f32 0.0, %v767
  %v769 = vpop.f32.mrb[0].mxu0
  %v770 = vpop.f32.mrb[0].mxu0
  %771 = vdwg.mxu0
  %s772 = smul.u32 1, 2
  %s773 = smul.addr %s772, 8
  %s774 = scalar_lea.vmem [#allocation2], %s773
  %v775 = vld [vmem:[%s774] sm:$0xff]
  %v776 = vadd.f32 %v775, %v766
  %s777 = smul.u32 6, 2
  %s778 = smul.addr %s777, 8
  %s779 = scalar_lea.vmem [#allocation2], %s778
  %v780 = vld [vmem:[%s779 + $0x8] sm:$0xff]
  %v781 = vadd.f32 %v780, %v768
  %v782 = vxor.u32 %v776, 2147483648
  %v783 = vmul.f32 %v782, 1.442695
  %v784 = vpow.pop %v783
  %v785 = vadd.f32 %v784, 1.0
  %v786 = vrcp.pop %v785
  %v787 = vmul.f32 1.0, %v786
  %v788 = vxor.u32 %v781, 2147483648
  %v789 = vmul.f32 %v788, 1.442695
  %v790 = vpow.pop %v789
  %v791 = vadd.f32 %v790, 1.0
  %v792 = vrcp.pop %v791
  %v793 = vmul.f32 1.0, %v792
  %v794 = vmul.f32 %v787, %v688
  %v795 = vtanh.pop %v776
  %797 = vrot.lane.b32.xlu0 %v795, 32
  %v798 = vpop.permute.xlu0 %797
  %v800 = vmul.f32 %v787, %v798
  %802 = vrot.lane.b32.xlu0 %v800, 32
  %v803 = vpop.permute.xlu0 %802
  %v805 = vadd.f32 %v794, %v803
  %v806 = vmul.f32 %v793, %v700
  %v807 = vtanh.pop %v781
  %809 = vrot.lane.b32.xlu0 %v807, 32
  %v810 = vpop.permute.xlu0 %809
  %v812 = vmul.f32 %v793, %v810
  %814 = vrot.lane.b32.xlu0 %v812, 32
  %v815 = vpop.permute.xlu0 %814
  %v817 = vadd.f32 %v806, %v815
  %v818 = vtanh.pop %v805
  %820 = vrot.lane.b32.xlu0 %v818, 32
  %v821 = vpop.permute.xlu0 %820
  %v823 = vmul.f32 %v787, %v821
  %v824 = vtanh.pop %v817
  %826 = vrot.lane.b32.xlu0 %v824, 32
  %v827 = vpop.permute.xlu0 %826
  %v829 = vmul.f32 %v793, %v827
  %831 = vrot.lane.b32.xlu0 %v823, 64
  %v832 = vpop.permute.xlu0 %831
  %s834 = scalar_lea.vmem [#allocation3], 8
  %835 = vst.msk [vmem:[%s834] sm:$0xff] %vm717, %v832
  %837 = vrot.lane.b32.xlu0 %v829, 96
  %v838 = vpop.permute.xlu0 %837
  %s840 = scalar_lea.vmem [#allocation3], 48
  %841 = vst.msk [vmem:[%s840] sm:$0xff] %vm724, %v838
  %v842 = vsel %vm717, %v832, %v838
  %v843 = vpack.c.bf16 %v842, %v842
  %v845 = vsel %vm610, %v843, 0
  %847 = vmatprep.subr.bf16.mxu0 %v595
  %848 = vmatpush1.bf16.msra.mxu0 %v594
  %849 = vmatprep.subr.bf16.mxu0 %v597
  %850 = vmatpush1.bf16.msra.mxu0 %v596
  %851 = vmatprep.subr.bf16.mxu0 %v599
  %852 = vmatpush1.bf16.msra.mxu0 %v598
  %853 = vmatprep.subr.bf16.mxu0 %v601
  %854 = vmatpush1.bf16.msra.mxu0 %v600
  %855 = vmatprep.subr.bf16.mxu0 0
  %856 = vmatpush1.bf16.msra.mxu0 0
  %857 = vmatprep.subr.bf16.mxu0 0
  %858 = vmatpush1.bf16.msra.mxu0 0
  %859 = vmatprep.subr.bf16.mxu0 0
  %860 = vmatpush1.bf16.msra.mxu0 0
  %861 = vmatprep.subr.bf16.mxu0 0
  %862 = vmatpush1.bf16.msra.mxu0 0
  %863 = vmatprep.subr.bf16.mxu0 0
  %864 = vmatpush1.bf16.msra.mxu0 0
  %865 = vmatprep.subr.bf16.mxu0 0
  %866 = vmatpush1.bf16.msra.mxu0 0
  %867 = vmatprep.subr.bf16.mxu0 0
  %868 = vmatpush1.bf16.msra.mxu0 0
  %869 = vmatprep.subr.bf16.mxu0 0
  %870 = vmatpush1.bf16.msra.mxu0 0
  %871 = vmatprep.subr.bf16.mxu0 0
  %872 = vmatpush1.bf16.msra.mxu0 0
  %873 = vmatprep.subr.bf16.mxu0 0
  %874 = vmatpush1.bf16.msra.mxu0 0
  %875 = vmatprep.subr.bf16.mxu0 0
  %876 = vmatpush1.bf16.msra.mxu0 0
  %877 = vmatprep.subr.bf16.mxu0 0
  %878 = vmatpush1.bf16.msra.mxu0 0
  %879 = vmatprep.mubr.bf16.mxu0 0
  %880 = vmatmul.mubr.bf16.gmra.mrb[0].mxu0 %v845
  %v881 = vpop.f32.mrb[0].mxu0
  %v882 = vadd.f32 0.0, %v881
  %v883 = vpop.f32.mrb[0].mxu0
  %v884 = vadd.f32 0.0, %v883
  %v885 = vpop.f32.mrb[0].mxu0
  %v886 = vpop.f32.mrb[0].mxu0
  %887 = vdwg.mxu0
  %s888 = smul.u32 2, 2
  %s889 = smul.addr %s888, 8
  %s890 = scalar_lea.vmem [#allocation2], %s889
  %v891 = vld [vmem:[%s890] sm:$0xff]
  %v892 = vadd.f32 %v891, %v882
  %s893 = smul.u32 5, 2
  %s894 = smul.addr %s893, 8
  %s895 = scalar_lea.vmem [#allocation2], %s894
  %v896 = vld [vmem:[%s895 + $0x8] sm:$0xff]
  %v897 = vadd.f32 %v896, %v884
  %v898 = vxor.u32 %v892, 2147483648
  %v899 = vmul.f32 %v898, 1.442695
  %v900 = vpow.pop %v899
  %v901 = vadd.f32 %v900, 1.0
  %v902 = vrcp.pop %v901
  %v903 = vmul.f32 1.0, %v902
  %v904 = vxor.u32 %v897, 2147483648
  %v905 = vmul.f32 %v904, 1.442695
  %v906 = vpow.pop %v905
  %v907 = vadd.f32 %v906, 1.0
  %v908 = vrcp.pop %v907
  %v909 = vmul.f32 1.0, %v908
  %v910 = vmul.f32 %v903, %v805
  %v911 = vtanh.pop %v892
  %913 = vrot.lane.b32.xlu0 %v911, 32
  %v914 = vpop.permute.xlu0 %913
  %v916 = vmul.f32 %v903, %v914
  %918 = vrot.lane.b32.xlu0 %v916, 32
  %v919 = vpop.permute.xlu0 %918
  %v921 = vadd.f32 %v910, %v919
  %v922 = vmul.f32 %v909, %v817
  %v923 = vtanh.pop %v897
  %925 = vrot.lane.b32.xlu0 %v923, 32
  %v926 = vpop.permute.xlu0 %925
  %v928 = vmul.f32 %v909, %v926
  %930 = vrot.lane.b32.xlu0 %v928, 32
  %v931 = vpop.permute.xlu0 %930
  %v933 = vadd.f32 %v922, %v931
  %v934 = vtanh.pop %v921
  %936 = vrot.lane.b32.xlu0 %v934, 32
  %v937 = vpop.permute.xlu0 %936
  %v939 = vmul.f32 %v903, %v937
  %v940 = vtanh.pop %v933
  %942 = vrot.lane.b32.xlu0 %v940, 32
  %v943 = vpop.permute.xlu0 %942
  %v945 = vmul.f32 %v909, %v943
  %947 = vrot.lane.b32.xlu0 %v939, 64
  %v948 = vpop.permute.xlu0 %947
  %s950 = scalar_lea.vmem [#allocation3], 16
  %951 = vst.msk [vmem:[%s950] sm:$0xff] %vm717, %v948
  %953 = vrot.lane.b32.xlu0 %v945, 96
  %v954 = vpop.permute.xlu0 %953
  %s956 = scalar_lea.vmem [#allocation3], 40
  %957 = vst.msk [vmem:[%s956] sm:$0xff] %vm724, %v954
  %v958 = vsel %vm717, %v948, %v954
  %v959 = vpack.c.bf16 %v958, %v958
  %v961 = vsel %vm610, %v959, 0
  %963 = vmatprep.subr.bf16.mxu0 %v595
  %964 = vmatpush1.bf16.msra.mxu0 %v594
  %965 = vmatprep.subr.bf16.mxu0 %v597
  %966 = vmatpush1.bf16.msra.mxu0 %v596
  %967 = vmatprep.subr.bf16.mxu0 %v599
  %968 = vmatpush1.bf16.msra.mxu0 %v598
  %969 = vmatprep.subr.bf16.mxu0 %v601
  %970 = vmatpush1.bf16.msra.mxu0 %v600
  %971 = vmatprep.subr.bf16.mxu0 0
  %972 = vmatpush1.bf16.msra.mxu0 0
  %973 = vmatprep.subr.bf16.mxu0 0
  %974 = vmatpush1.bf16.msra.mxu0 0
  %975 = vmatprep.subr.bf16.mxu0 0
  %976 = vmatpush1.bf16.msra.mxu0 0
  %977 = vmatprep.subr.bf16.mxu0 0
  %978 = vmatpush1.bf16.msra.mxu0 0
  %979 = vmatprep.subr.bf16.mxu0 0
  %980 = vmatpush1.bf16.msra.mxu0 0
  %981 = vmatprep.subr.bf16.mxu0 0
  %982 = vmatpush1.bf16.msra.mxu0 0
  %983 = vmatprep.subr.bf16.mxu0 0
  %984 = vmatpush1.bf16.msra.mxu0 0
  %985 = vmatprep.subr.bf16.mxu0 0
  %986 = vmatpush1.bf16.msra.mxu0 0
  %987 = vmatprep.subr.bf16.mxu0 0
  %988 = vmatpush1.bf16.msra.mxu0 0
  %989 = vmatprep.subr.bf16.mxu0 0
  %990 = vmatpush1.bf16.msra.mxu0 0
  %991 = vmatprep.subr.bf16.mxu0 0
  %992 = vmatpush1.bf16.msra.mxu0 0
  %993 = vmatprep.subr.bf16.mxu0 0
  %994 = vmatpush1.bf16.msra.mxu0 0
  %995 = vmatprep.mubr.bf16.mxu0 0
  %996 = vmatmul.mubr.bf16.gmra.mrb[0].mxu0 %v961
  %v997 = vpop.f32.mrb[0].mxu0
  %v998 = vadd.f32 0.0, %v997
  %v999 = vpop.f32.mrb[0].mxu0
  %v1000 = vadd.f32 0.0, %v999
  %v1001 = vpop.f32.mrb[0].mxu0
  %v1002 = vpop.f32.mrb[0].mxu0
  %1003 = vdwg.mxu0
  %s1004 = smul.u32 3, 2
  %s1005 = smul.addr %s1004, 8
  %s1006 = scalar_lea.vmem [#allocation2], %s1005
  %v1007 = vld [vmem:[%s1006] sm:$0xff]
  %v1008 = vadd.f32 %v1007, %v998
  %s1009 = smul.u32 4, 2
  %s1010 = smul.addr %s1009, 8
  %s1011 = scalar_lea.vmem [#allocation2], %s1010
  %v1012 = vld [vmem:[%s1011 + $0x8] sm:$0xff]
  %v1013 = vadd.f32 %v1012, %v1000
  %v1014 = vxor.u32 %v1008, 2147483648
  %v1015 = vmul.f32 %v1014, 1.442695
  %v1016 = vpow.pop %v1015
  %v1017 = vadd.f32 %v1016, 1.0
  %v1018 = vrcp.pop %v1017
  %v1019 = vmul.f32 1.0, %v1018
  %v1020 = vxor.u32 %v1013, 2147483648
  %v1021 = vmul.f32 %v1020, 1.442695
  %v1022 = vpow.pop %v1021
  %v1023 = vadd.f32 %v1022, 1.0
  %v1024 = vrcp.pop %v1023
  %v1025 = vmul.f32 1.0, %v1024
  %v1026 = vmul.f32 %v1019, %v921
  %v1027 = vtanh.pop %v1008
  %1029 = vrot.lane.b32.xlu0 %v1027, 32
  %v1030 = vpop.permute.xlu0 %1029
  %v1032 = vmul.f32 %v1019, %v1030
  %1034 = vrot.lane.b32.xlu0 %v1032, 32
  %v1035 = vpop.permute.xlu0 %1034
  %v1037 = vadd.f32 %v1026, %v1035
  %v1038 = vmul.f32 %v1025, %v933
  %v1039 = vtanh.pop %v1013
  %1041 = vrot.lane.b32.xlu0 %v1039, 32
  %v1042 = vpop.permute.xlu0 %1041
  %v1044 = vmul.f32 %v1025, %v1042
  %1046 = vrot.lane.b32.xlu0 %v1044, 32
  %v1047 = vpop.permute.xlu0 %1046
  %v1049 = vadd.f32 %v1038, %v1047
  %v1050 = vtanh.pop %v1037
  %1052 = vrot.lane.b32.xlu0 %v1050, 32
  %v1053 = vpop.permute.xlu0 %1052
  %v1055 = vmul.f32 %v1019, %v1053
  %v1056 = vtanh.pop %v1049
  %1058 = vrot.lane.b32.xlu0 %v1056, 32
  %v1059 = vpop.permute.xlu0 %1058
  %v1061 = vmul.f32 %v1025, %v1059
  %1063 = vrot.lane.b32.xlu0 %v1055, 64
  %v1064 = vpop.permute.xlu0 %1063
  %s1066 = scalar_lea.vmem [#allocation3], 24
  %1067 = vst.msk [vmem:[%s1066] sm:$0xff] %vm717, %v1064
  %1069 = vrot.lane.b32.xlu0 %v1061, 96
  %v1070 = vpop.permute.xlu0 %1069
  %s1072 = scalar_lea.vmem [#allocation3], 32
  %1073 = vst.msk [vmem:[%s1072] sm:$0xff] %vm724, %v1070
  %v1074 = vsel %vm717, %v1064, %v1070
  %v1075 = vpack.c.bf16 %v1074, %v1074
  %v1077 = vsel %vm610, %v1075, 0
  %1079 = vmatprep.subr.bf16.mxu0 %v595
  %1080 = vmatpush1.bf16.msra.mxu0 %v594
  %1081 = vmatprep.subr.bf16.mxu0 %v597
  %1082 = vmatpush1.bf16.msra.mxu0 %v596
  %1083 = vmatprep.subr.bf16.mxu0 %v599
  %1084 = vmatpush1.bf16.msra.mxu0 %v598
  %1085 = vmatprep.subr.bf16.mxu0 %v601
  %1086 = vmatpush1.bf16.msra.mxu0 %v600
  %1087 = vmatprep.subr.bf16.mxu0 0
  %1088 = vmatpush1.bf16.msra.mxu0 0
  %1089 = vmatprep.subr.bf16.mxu0 0
  %1090 = vmatpush1.bf16.msra.mxu0 0
  %1091 = vmatprep.subr.bf16.mxu0 0
  %1092 = vmatpush1.bf16.msra.mxu0 0
  %1093 = vmatprep.subr.bf16.mxu0 0
  %1094 = vmatpush1.bf16.msra.mxu0 0
  %1095 = vmatprep.subr.bf16.mxu0 0
  %1096 = vmatpush1.bf16.msra.mxu0 0
  %1097 = vmatprep.subr.bf16.mxu0 0
  %1098 = vmatpush1.bf16.msra.mxu0 0
  %1099 = vmatprep.subr.bf16.mxu0 0
  %1100 = vmatpush1.bf16.msra.mxu0 0
  %1101 = vmatprep.subr.bf16.mxu0 0
  %1102 = vmatpush1.bf16.msra.mxu0 0
  %1103 = vmatprep.subr.bf16.mxu0 0
  %1104 = vmatpush1.bf16.msra.mxu0 0
  %1105 = vmatprep.subr.bf16.mxu0 0
  %1106 = vmatpush1.bf16.msra.mxu0 0
  %1107 = vmatprep.subr.bf16.mxu0 0
  %1108 = vmatpush1.bf16.msra.mxu0 0
  %1109 = vmatprep.subr.bf16.mxu0 0
  %1110 = vmatpush1.bf16.msra.mxu0 0
  %1111 = vmatprep.mubr.bf16.mxu0 0
  %1112 = vmatmul.mubr.bf16.gmra.mrb[0].mxu0 %v1077
  %v1113 = vpop.f32.mrb[0].mxu0
  %v1114 = vadd.f32 0.0, %v1113
  %v1115 = vpop.f32.mrb[0].mxu0
  %v1116 = vadd.f32 0.0, %v1115
  %v1117 = vpop.f32.mrb[0].mxu0
  %v1118 = vpop.f32.mrb[0].mxu0
  %1119 = vdwg.mxu0
  %v1120 = vld [vmem:[%s1011] sm:$0xff]
  %v1121 = vadd.f32 %v1120, %v1114
  %v1122 = vld [vmem:[%s1006 + $0x8] sm:$0xff]
  %v1123 = vadd.f32 %v1122, %v1116
  %v1124 = vxor.u32 %v1121, 2147483648
  %v1125 = vmul.f32 %v1124, 1.442695
  %v1126 = vpow.pop %v1125
  %v1127 = vadd.f32 %v1126, 1.0
  %v1128 = vrcp.pop %v1127
  %v1129 = vmul.f32 1.0, %v1128
  %v1130 = vxor.u32 %v1123, 2147483648
  %v1131 = vmul.f32 %v1130, 1.442695
  %v1132 = vpow.pop %v1131
  %v1133 = vadd.f32 %v1132, 1.0
  %v1134 = vrcp.pop %v1133
  %v1135 = vmul.f32 1.0, %v1134
  %v1136 = vmul.f32 %v1129, %v1037
  %v1137 = vtanh.pop %v1121
  %1139 = vrot.lane.b32.xlu0 %v1137, 32
  %v1140 = vpop.permute.xlu0 %1139
  %v1142 = vmul.f32 %v1129, %v1140
  %1144 = vrot.lane.b32.xlu0 %v1142, 32
  %v1145 = vpop.permute.xlu0 %1144
  %v1147 = vadd.f32 %v1136, %v1145
  %v1148 = vmul.f32 %v1135, %v1049
  %v1149 = vtanh.pop %v1123
  %1151 = vrot.lane.b32.xlu0 %v1149, 32
  %v1152 = vpop.permute.xlu0 %1151
  %v1154 = vmul.f32 %v1135, %v1152
  %1156 = vrot.lane.b32.xlu0 %v1154, 32
  %v1157 = vpop.permute.xlu0 %1156
  %v1159 = vadd.f32 %v1148, %v1157
  %v1160 = vtanh.pop %v1147
  %1162 = vrot.lane.b32.xlu0 %v1160, 32
  %v1163 = vpop.permute.xlu0 %1162
  %v1165 = vmul.f32 %v1129, %v1163
  %v1166 = vtanh.pop %v1159
  %1168 = vrot.lane.b32.xlu0 %v1166, 32
  %v1169 = vpop.permute.xlu0 %1168
  %v1171 = vmul.f32 %v1135, %v1169
  %1173 = vrot.lane.b32.xlu0 %v1165, 64
  %v1174 = vpop.permute.xlu0 %1173
  %1176 = vst.msk [vmem:[%s1072] sm:$0xff] %vm717, %v1174
  %1178 = vrot.lane.b32.xlu0 %v1171, 96
  %v1179 = vpop.permute.xlu0 %1178
  %1181 = vst.msk [vmem:[%s1066] sm:$0xff] %vm724, %v1179
  %v1182 = vsel %vm717, %v1174, %v1179
  %v1183 = vpack.c.bf16 %v1182, %v1182
  %v1185 = vsel %vm610, %v1183, 0
  %1187 = vmatprep.subr.bf16.mxu0 %v595
  %1188 = vmatpush1.bf16.msra.mxu0 %v594
  %1189 = vmatprep.subr.bf16.mxu0 %v597
  %1190 = vmatpush1.bf16.msra.mxu0 %v596
  %1191 = vmatprep.subr.bf16.mxu0 %v599
  %1192 = vmatpush1.bf16.msra.mxu0 %v598
  %1193 = vmatprep.subr.bf16.mxu0 %v601
  %1194 = vmatpush1.bf16.msra.mxu0 %v600
  %1195 = vmatprep.subr.bf16.mxu0 0
  %1196 = vmatpush1.bf16.msra.mxu0 0
  %1197 = vmatprep.subr.bf16.mxu0 0
  %1198 = vmatpush1.bf16.msra.mxu0 0
  %1199 = vmatprep.subr.bf16.mxu0 0
  %1200 = vmatpush1.bf16.msra.mxu0 0
  %1201 = vmatprep.subr.bf16.mxu0 0
  %1202 = vmatpush1.bf16.msra.mxu0 0
  %1203 = vmatprep.subr.bf16.mxu0 0
  %1204 = vmatpush1.bf16.msra.mxu0 0
  %1205 = vmatprep.subr.bf16.mxu0 0
  %1206 = vmatpush1.bf16.msra.mxu0 0
  %1207 = vmatprep.subr.bf16.mxu0 0
  %1208 = vmatpush1.bf16.msra.mxu0 0
  %1209 = vmatprep.subr.bf16.mxu0 0
  %1210 = vmatpush1.bf16.msra.mxu0 0
  %1211 = vmatprep.subr.bf16.mxu0 0
  %1212 = vmatpush1.bf16.msra.mxu0 0
  %1213 = vmatprep.subr.bf16.mxu0 0
  %1214 = vmatpush1.bf16.msra.mxu0 0
  %1215 = vmatprep.subr.bf16.mxu0 0
  %1216 = vmatpush1.bf16.msra.mxu0 0
  %1217 = vmatprep.subr.bf16.mxu0 0
  %1218 = vmatpush1.bf16.msra.mxu0 0
  %1219 = vmatprep.mubr.bf16.mxu0 0
  %1220 = vmatmul.mubr.bf16.gmra.mrb[0].mxu0 %v1185
  %v1221 = vpop.f32.mrb[0].mxu0
  %v1222 = vadd.f32 0.0, %v1221
  %v1223 = vpop.f32.mrb[0].mxu0
  %v1224 = vadd.f32 0.0, %v1223
  %v1225 = vpop.f32.mrb[0].mxu0
  %v1226 = vpop.f32.mrb[0].mxu0
  %1227 = vdwg.mxu0
  %v1228 = vld [vmem:[%s895] sm:$0xff]
  %v1229 = vadd.f32 %v1228, %v1222
  %v1230 = vld [vmem:[%s890 + $0x8] sm:$0xff]
  %v1231 = vadd.f32 %v1230, %v1224
  %v1232 = vxor.u32 %v1229, 2147483648
  %v1233 = vmul.f32 %v1232, 1.442695
  %v1234 = vpow.pop %v1233
  %v1235 = vadd.f32 %v1234, 1.0
  %v1236 = vrcp.pop %v1235
  %v1237 = vmul.f32 1.0, %v1236
  %v1238 = vxor.u32 %v1231, 2147483648
  %v1239 = vmul.f32 %v1238, 1.442695
  %v1240 = vpow.pop %v1239
  %v1241 = vadd.f32 %v1240, 1.0
  %v1242 = vrcp.pop %v1241
  %v1243 = vmul.f32 1.0, %v1242
  %v1244 = vmul.f32 %v1237, %v1147
  %v1245 = vtanh.pop %v1229
  %1247 = vrot.lane.b32.xlu0 %v1245, 32
  %v1248 = vpop.permute.xlu0 %1247
  %v1250 = vmul.f32 %v1237, %v1248
  %1252 = vrot.lane.b32.xlu0 %v1250, 32
  %v1253 = vpop.permute.xlu0 %1252
  %v1255 = vadd.f32 %v1244, %v1253
  %v1256 = vmul.f32 %v1243, %v1159
  %v1257 = vtanh.pop %v1231
  %1259 = vrot.lane.b32.xlu0 %v1257, 32
  %v1260 = vpop.permute.xlu0 %1259
  %v1262 = vmul.f32 %v1243, %v1260
  %1264 = vrot.lane.b32.xlu0 %v1262, 32
  %v1265 = vpop.permute.xlu0 %1264
  %v1267 = vadd.f32 %v1256, %v1265
  %v1268 = vtanh.pop %v1255
  %1270 = vrot.lane.b32.xlu0 %v1268, 32
  %v1271 = vpop.permute.xlu0 %1270
  %v1273 = vmul.f32 %v1237, %v1271
  %v1274 = vtanh.pop %v1267
  %1276 = vrot.lane.b32.xlu0 %v1274, 32
  %v1277 = vpop.permute.xlu0 %1276
  %v1279 = vmul.f32 %v1243, %v1277
  %1281 = vrot.lane.b32.xlu0 %v1273, 64
  %v1282 = vpop.permute.xlu0 %1281
  %1284 = vst.msk [vmem:[%s956] sm:$0xff] %vm717, %v1282
  %1286 = vrot.lane.b32.xlu0 %v1279, 96
  %v1287 = vpop.permute.xlu0 %1286
  %1289 = vst.msk [vmem:[%s950] sm:$0xff] %vm724, %v1287
  %v1290 = vsel %vm717, %v1282, %v1287
  %v1291 = vpack.c.bf16 %v1290, %v1290
  %v1293 = vsel %vm610, %v1291, 0
  %1295 = vmatprep.subr.bf16.mxu0 %v595
  %1296 = vmatpush1.bf16.msra.mxu0 %v594
  %1297 = vmatprep.subr.bf16.mxu0 %v597
  %1298 = vmatpush1.bf16.msra.mxu0 %v596
  %1299 = vmatprep.subr.bf16.mxu0 %v599
  %1300 = vmatpush1.bf16.msra.mxu0 %v598
  %1301 = vmatprep.subr.bf16.mxu0 %v601
  %1302 = vmatpush1.bf16.msra.mxu0 %v600
  %1303 = vmatprep.subr.bf16.mxu0 0
  %1304 = vmatpush1.bf16.msra.mxu0 0
  %1305 = vmatprep.subr.bf16.mxu0 0
  %1306 = vmatpush1.bf16.msra.mxu0 0
  %1307 = vmatprep.subr.bf16.mxu0 0
  %1308 = vmatpush1.bf16.msra.mxu0 0
  %1309 = vmatprep.subr.bf16.mxu0 0
  %1310 = vmatpush1.bf16.msra.mxu0 0
  %1311 = vmatprep.subr.bf16.mxu0 0
  %1312 = vmatpush1.bf16.msra.mxu0 0
  %1313 = vmatprep.subr.bf16.mxu0 0
  %1314 = vmatpush1.bf16.msra.mxu0 0
  %1315 = vmatprep.subr.bf16.mxu0 0
  %1316 = vmatpush1.bf16.msra.mxu0 0
  %1317 = vmatprep.subr.bf16.mxu0 0
  %1318 = vmatpush1.bf16.msra.mxu0 0
  %1319 = vmatprep.subr.bf16.mxu0 0
  %1320 = vmatpush1.bf16.msra.mxu0 0
  %1321 = vmatprep.subr.bf16.mxu0 0
  %1322 = vmatpush1.bf16.msra.mxu0 0
  %1323 = vmatprep.subr.bf16.mxu0 0
  %1324 = vmatpush1.bf16.msra.mxu0 0
  %1325 = vmatprep.subr.bf16.mxu0 0
  %1326 = vmatpush1.bf16.msra.mxu0 0
  %1327 = vmatprep.mubr.bf16.mxu0 0
  %1328 = vmatmul.mubr.bf16.gmra.mrb[0].mxu0 %v1293
  %v1329 = vpop.f32.mrb[0].mxu0
  %v1330 = vadd.f32 0.0, %v1329
  %v1331 = vpop.f32.mrb[0].mxu0
  %v1332 = vadd.f32 0.0, %v1331
  %v1333 = vpop.f32.mrb[0].mxu0
  %v1334 = vpop.f32.mrb[0].mxu0
  %1335 = vdwg.mxu0
  %v1336 = vld [vmem:[%s779] sm:$0xff]
  %v1337 = vadd.f32 %v1336, %v1330
  %v1338 = vld [vmem:[%s774 + $0x8] sm:$0xff]
  %v1339 = vadd.f32 %v1338, %v1332
  %v1340 = vxor.u32 %v1337, 2147483648
  %v1341 = vmul.f32 %v1340, 1.442695
  %v1342 = vpow.pop %v1341
  %v1343 = vadd.f32 %v1342, 1.0
  %v1344 = vrcp.pop %v1343
  %v1345 = vmul.f32 1.0, %v1344
  %v1346 = vxor.u32 %v1339, 2147483648
  %v1347 = vmul.f32 %v1346, 1.442695
  %v1348 = vpow.pop %v1347
  %v1349 = vadd.f32 %v1348, 1.0
  %v1350 = vrcp.pop %v1349
  %v1351 = vmul.f32 1.0, %v1350
  %v1352 = vmul.f32 %v1345, %v1255
  %v1353 = vtanh.pop %v1337
  %1355 = vrot.lane.b32.xlu0 %v1353, 32
  %v1356 = vpop.permute.xlu0 %1355
  %v1358 = vmul.f32 %v1345, %v1356
  %1360 = vrot.lane.b32.xlu0 %v1358, 32
  %v1361 = vpop.permute.xlu0 %1360
  %v1363 = vadd.f32 %v1352, %v1361
  %v1364 = vmul.f32 %v1351, %v1267
  %v1365 = vtanh.pop %v1339
  %1367 = vrot.lane.b32.xlu0 %v1365, 32
  %v1368 = vpop.permute.xlu0 %1367
  %v1370 = vmul.f32 %v1351, %v1368
  %1372 = vrot.lane.b32.xlu0 %v1370, 32
  %v1373 = vpop.permute.xlu0 %1372
  %v1375 = vadd.f32 %v1364, %v1373
  %v1376 = vtanh.pop %v1363
  %1378 = vrot.lane.b32.xlu0 %v1376, 32
  %v1379 = vpop.permute.xlu0 %1378
  %v1381 = vmul.f32 %v1345, %v1379
  %v1382 = vtanh.pop %v1375
  %1384 = vrot.lane.b32.xlu0 %v1382, 32
  %v1385 = vpop.permute.xlu0 %1384
  %v1387 = vmul.f32 %v1351, %v1385
  %1389 = vrot.lane.b32.xlu0 %v1381, 64
  %v1390 = vpop.permute.xlu0 %1389
  %1392 = vst.msk [vmem:[%s840] sm:$0xff] %vm717, %v1390
  %1394 = vrot.lane.b32.xlu0 %v1387, 96
  %v1395 = vpop.permute.xlu0 %1394
  %1397 = vst.msk [vmem:[%s834] sm:$0xff] %vm724, %v1395
  %v1398 = vsel %vm717, %v1390, %v1395
  %v1399 = vpack.c.bf16 %v1398, %v1398
  %v1401 = vsel %vm610, %v1399, 0
  %1403 = vmatprep.subr.bf16.mxu0 %v595
  %1404 = vmatpush1.bf16.msra.mxu0 %v594
  %1405 = vmatprep.subr.bf16.mxu0 %v597
  %1406 = vmatpush1.bf16.msra.mxu0 %v596
  %1407 = vmatprep.subr.bf16.mxu0 %v599
  %1408 = vmatpush1.bf16.msra.mxu0 %v598
  %1409 = vmatprep.subr.bf16.mxu0 %v601
  %1410 = vmatpush1.bf16.msra.mxu0 %v600
  %1411 = vmatprep.subr.bf16.mxu0 0
  %1412 = vmatpush1.bf16.msra.mxu0 0
  %1413 = vmatprep.subr.bf16.mxu0 0
  %1414 = vmatpush1.bf16.msra.mxu0 0
  %1415 = vmatprep.subr.bf16.mxu0 0
  %1416 = vmatpush1.bf16.msra.mxu0 0
  %1417 = vmatprep.subr.bf16.mxu0 0
  %1418 = vmatpush1.bf16.msra.mxu0 0
  %1419 = vmatprep.subr.bf16.mxu0 0
  %1420 = vmatpush1.bf16.msra.mxu0 0
  %1421 = vmatprep.subr.bf16.mxu0 0
  %1422 = vmatpush1.bf16.msra.mxu0 0
  %1423 = vmatprep.subr.bf16.mxu0 0
  %1424 = vmatpush1.bf16.msra.mxu0 0
  %1425 = vmatprep.subr.bf16.mxu0 0
  %1426 = vmatpush1.bf16.msra.mxu0 0
  %1427 = vmatprep.subr.bf16.mxu0 0
  %1428 = vmatpush1.bf16.msra.mxu0 0
  %1429 = vmatprep.subr.bf16.mxu0 0
  %1430 = vmatpush1.bf16.msra.mxu0 0
  %1431 = vmatprep.subr.bf16.mxu0 0
  %1432 = vmatpush1.bf16.msra.mxu0 0
  %1433 = vmatprep.subr.bf16.mxu0 0
  %1434 = vmatpush1.bf16.msra.mxu0 0
  %1435 = vmatprep.mubr.bf16.mxu0 0
  %1436 = vmatmul.mubr.bf16.gmra.mrb[0].mxu0 %v1401
  %v1437 = vpop.f32.mrb[0].mxu0
  %v1438 = vadd.f32 0.0, %v1437
  %v1439 = vpop.f32.mrb[0].mxu0
  %v1440 = vadd.f32 0.0, %v1439
  %v1441 = vpop.f32.mrb[0].mxu0
  %v1442 = vpop.f32.mrb[0].mxu0
  %1443 = vdwg.mxu0
  %v1444 = vld [vmem:[%s662] sm:$0xff]
  %v1445 = vadd.f32 %v1444, %v1438
  %v1446 = vld [vmem:[%s657 + $0x8] sm:$0xff]
  %v1447 = vadd.f32 %v1446, %v1440
  %v1448 = vxor.u32 %v1445, 2147483648
  %v1449 = vmul.f32 %v1448, 1.442695
  %v1450 = vpow.pop %v1449
  %v1451 = vadd.f32 %v1450, 1.0
  %v1452 = vrcp.pop %v1451
  %v1453 = vmul.f32 1.0, %v1452
  %v1454 = vxor.u32 %v1447, 2147483648
  %v1455 = vmul.f32 %v1454, 1.442695
  %v1456 = vpow.pop %v1455
  %v1457 = vadd.f32 %v1456, 1.0
  %v1458 = vrcp.pop %v1457
  %v1459 = vmul.f32 1.0, %v1458
  %v1460 = vmul.f32 %v1453, %v1363
  %v1461 = vtanh.pop %v1445
  %1463 = vrot.lane.b32.xlu0 %v1461, 32
  %v1464 = vpop.permute.xlu0 %1463
  %v1466 = vmul.f32 %v1453, %v1464
  %1468 = vrot.lane.b32.xlu0 %v1466, 32
  %v1469 = vpop.permute.xlu0 %1468
  %v1471 = vadd.f32 %v1460, %v1469
  %v1472 = vmul.f32 %v1459, %v1375
  %v1473 = vtanh.pop %v1447
  %1475 = vrot.lane.b32.xlu0 %v1473, 32
  %v1476 = vpop.permute.xlu0 %1475
  %v1478 = vmul.f32 %v1459, %v1476
  %1480 = vrot.lane.b32.xlu0 %v1478, 32
  %v1481 = vpop.permute.xlu0 %1480
  %v1483 = vadd.f32 %v1472, %v1481
  %v1484 = vtanh.pop %v1471
  %1486 = vrot.lane.b32.xlu0 %v1484, 32
  %v1487 = vpop.permute.xlu0 %1486
  %v1489 = vmul.f32 %v1453, %v1487
  %v1490 = vtanh.pop %v1483
  %1492 = vrot.lane.b32.xlu0 %v1490, 32
  %v1493 = vpop.permute.xlu0 %1492
  %v1495 = vmul.f32 %v1459, %v1493
  %1497 = vrot.lane.b32.xlu0 %v1489, 64
  %v1498 = vpop.permute.xlu0 %1497
  %1500 = vst.msk [vmem:[%s723] sm:$0xff] %vm717, %v1498
  %1502 = vrot.lane.b32.xlu0 %v1495, 96
  %v1503 = vpop.permute.xlu0 %1502
  %1505 = vst.msk [vmem:[#allocation3] sm:$0xff] %vm724, %v1503
  %v1506 = vld [vmem:[#allocation3] sm:$0xff]
  %v1507 = vld [vmem:[#allocation3 + $0x8] sm:$0xff]
  %v1508 = vld [vmem:[#allocation3 + $0x10] sm:$0xff]
  %v1509 = vld [vmem:[#allocation3 + $0x18] sm:$0xff]
  %v1510 = vld [vmem:[#allocation3 + $0x20] sm:$0xff]
  %v1511 = vld [vmem:[#allocation3 + $0x28] sm:$0xff]
  %v1512 = vld [vmem:[#allocation3 + $0x30] sm:$0xff]
  %v1513 = vld [vmem:[#allocation3 + $0x38] sm:$0xff]
  %v1514 = vpack.c.bf16 %v1507, %v1506
  %v1515 = vpack.c.bf16 %v1509, %v1508
  %v1516 = vpack.c.bf16 %v1511, %v1510
  %v1517 = vpack.c.bf16 %v1513, %v1512
  %v1518 = vld [vmem:[%s7] sm:$0xf]
  %v1519 = vld [vmem:[%s7 + $0x4] sm:$0xf]
  %v1520 = vld [vmem:[%s7 + $0x8] sm:$0xf]
  %v1521 = vld [vmem:[%s7 + $0xc] sm:$0xf]
  %v1522 = vld [vmem:[%s7 + $0x10] sm:$0xf]
  %v1523 = vld [vmem:[%s7 + $0x14] sm:$0xf]
  %v1524 = vld [vmem:[%s7 + $0x18] sm:$0xf]
  %v1525 = vld [vmem:[%s7 + $0x1c] sm:$0xf]
  %v1526 = vld [vmem:[%s8] sm:$0x1]
  %v1528 = vlaneseq
  %v1529 = vshrl.u32 %v1528, 7
  %v1530 = vsub.s32 0, %v1529
  %v1531 = vrot.slane %v1526, %v1530
  %v1541 = vunpack.c.l.b16 %v1518
  %v1542 = vunpack.c.l.b16 %v1519
  %v1543 = vunpack.c.l.b16 %v1520
  %v1544 = vunpack.c.l.b16 %v1521
  %v1545 = vunpack.c.l.b16 %v1522
  %v1546 = vunpack.c.l.b16 %v1523
  %v1547 = vunpack.c.l.b16 %v1524
  %v1548 = vunpack.c.l.b16 %v1525
  %v1549 = vpack.c.b16 %v1542, %v1541
  %v1550 = vpack.c.b16 %v1544, %v1543
  %v1551 = vpack.c.b16 %v1546, %v1545
  %v1552 = vpack.c.b16 %v1548, %v1547
  %v1558 = vsel %vm610, %v1514, 0
  %v1561 = vsel %vm610, %v1515, 0
  %v1564 = vsel %vm610, %v1516, 0
  %v1567 = vsel %vm610, %v1517, 0
  %1569 = vmatprep.subr.bf16.mxu0 0
  %1570 = vmatpush1.bf16.msra.mxu0 %v1549
  %1571 = vmatprep.subr.bf16.mxu0 0
  %1572 = vmatpush1.bf16.msra.mxu0 %v1550
  %1573 = vmatprep.subr.bf16.mxu0 0
  %1574 = vmatpush1.bf16.msra.mxu0 %v1551
  %1575 = vmatprep.subr.bf16.mxu0 0
  %1576 = vmatpush1.bf16.msra.mxu0 %v1552
  %1577 = vmatprep.subr.bf16.mxu0 0
  %1578 = vmatpush1.bf16.msra.mxu0 0
  %1579 = vmatprep.subr.bf16.mxu0 0
  %1580 = vmatpush1.bf16.msra.mxu0 0
  %1581 = vmatprep.subr.bf16.mxu0 0
  %1582 = vmatpush1.bf16.msra.mxu0 0
  %1583 = vmatprep.subr.bf16.mxu0 0
  %1584 = vmatpush1.bf16.msra.mxu0 0
  %1585 = vmatprep.subr.bf16.mxu0 0
  %1586 = vmatpush1.bf16.msra.mxu0 0
  %1587 = vmatprep.subr.bf16.mxu0 0
  %1588 = vmatpush1.bf16.msra.mxu0 0
  %1589 = vmatprep.subr.bf16.mxu0 0
  %1590 = vmatpush1.bf16.msra.mxu0 0
  %1591 = vmatprep.subr.bf16.mxu0 0
  %1592 = vmatpush1.bf16.msra.mxu0 0
  %1593 = vmatprep.subr.bf16.mxu0 0
  %1594 = vmatpush1.bf16.msra.mxu0 0
  %1595 = vmatprep.subr.bf16.mxu0 0
  %1596 = vmatpush1.bf16.msra.mxu0 0
  %1597 = vmatprep.subr.bf16.mxu0 0
  %1598 = vmatpush1.bf16.msra.mxu0 0
  %1599 = vmatprep.subr.bf16.mxu0 0
  %1600 = vmatpush1.bf16.msra.mxu0 0
  %1601 = vmatprep.mubr.bf16.mxu0 0
  %1602 = vmatmul.mubr.bf16.gmra.mrb[0].mxu0 %v1558
  %v1603 = vpop.f32.mrb[0].mxu0
  %v1604 = vadd.f32 %v1531, %v1603
  %v1605 = vpop.f32.mrb[0].mxu0
  %v1606 = vpop.f32.mrb[0].mxu0
  %v1607 = vadd.f32 %v1531, %v1606
  %v1608 = vpop.f32.mrb[0].mxu0
  %1609 = vmatprep.mubr.bf16.mxu0 0
  %1610 = vmatmul.mubr.bf16.gmra.mrb[0].mxu0 %v1561
  %v1611 = vpop.f32.mrb[0].mxu0
  %v1612 = vadd.f32 %v1531, %v1611
  %v1613 = vpop.f32.mrb[0].mxu0
  %v1614 = vpop.f32.mrb[0].mxu0
  %v1615 = vadd.f32 %v1531, %v1614
  %v1616 = vpop.f32.mrb[0].mxu0
  %1617 = vmatprep.mubr.bf16.mxu0 0
  %1618 = vmatmul.mubr.bf16.gmra.mrb[0].mxu0 %v1564
  %v1619 = vpop.f32.mrb[0].mxu0
  %v1620 = vadd.f32 %v1531, %v1619
  %v1621 = vpop.f32.mrb[0].mxu0
  %v1622 = vpop.f32.mrb[0].mxu0
  %v1623 = vadd.f32 %v1531, %v1622
  %v1624 = vpop.f32.mrb[0].mxu0
  %1625 = vmatprep.mubr.bf16.mxu0 0
  %1626 = vmatmul.mubr.bf16.gmra.mrb[0].mxu0 %v1567
  %v1627 = vpop.f32.mrb[0].mxu0
  %v1628 = vadd.f32 %v1531, %v1627
  %v1629 = vpop.f32.mrb[0].mxu0
  %v1630 = vpop.f32.mrb[0].mxu0
  %v1631 = vadd.f32 %v1531, %v1630
  %v1632 = vpop.f32.mrb[0].mxu0
  %1633 = vdwg.mxu0
  %1634 = vmax.xlane.f32.xlu0 %v1604
  %v1635 = vpop.xlane.xlu0 %1634
  %1636 = vmax.xlane.f32.xlu0 %v1607
  %v1637 = vpop.xlane.xlu0 %1636
  %1638 = vmax.xlane.f32.xlu0 %v1612
  %v1639 = vpop.xlane.xlu0 %1638
  %1640 = vmax.xlane.f32.xlu0 %v1615
  %v1641 = vpop.xlane.xlu0 %1640
  %1642 = vmax.xlane.f32.xlu0 %v1620
  %v1643 = vpop.xlane.xlu0 %1642
  %1644 = vmax.xlane.f32.xlu0 %v1623
  %v1645 = vpop.xlane.xlu0 %1644
  %1646 = vmax.xlane.f32.xlu0 %v1628
  %v1647 = vpop.xlane.xlu0 %1646
  %1648 = vmax.xlane.f32.xlu0 %v1631
  %v1649 = vpop.xlane.xlu0 %1648
  %v1650 = vsub.f32 %v1604, %v1635
  %v1651 = vsub.f32 %v1607, %v1637
  %v1652 = vsub.f32 %v1612, %v1639
  %v1653 = vsub.f32 %v1615, %v1641
  %v1654 = vsub.f32 %v1620, %v1643
  %v1655 = vsub.f32 %v1623, %v1645
  %v1656 = vsub.f32 %v1628, %v1647
  %v1657 = vsub.f32 %v1631, %v1649
  %v1658 = vmul.f32 %v1650, 1.442695
  %v1659 = vpow.pop %v1658
  %v1660 = vmul.f32 %v1651, 1.442695
  %v1661 = vpow.pop %v1660
  %v1662 = vmul.f32 %v1652, 1.442695
  %v1663 = vpow.pop %v1662
  %v1664 = vmul.f32 %v1653, 1.442695
  %v1665 = vpow.pop %v1664
  %v1666 = vmul.f32 %v1654, 1.442695
  %v1667 = vpow.pop %v1666
  %v1668 = vmul.f32 %v1655, 1.442695
  %v1669 = vpow.pop %v1668
  %v1670 = vmul.f32 %v1656, 1.442695
  %v1671 = vpow.pop %v1670
  %v1672 = vmul.f32 %v1657, 1.442695
  %v1673 = vpow.pop %v1672
  %1674 = vadd.xlane.f32.xlu0 %v1659
  %v1675 = vpop.xlane.xlu0 %1674
  %1676 = vadd.xlane.f32.xlu0 %v1661
  %v1677 = vpop.xlane.xlu0 %1676
  %1678 = vadd.xlane.f32.xlu0 %v1663
  %v1679 = vpop.xlane.xlu0 %1678
  %1680 = vadd.xlane.f32.xlu0 %v1665
  %v1681 = vpop.xlane.xlu0 %1680
  %1682 = vadd.xlane.f32.xlu0 %v1667
  %v1683 = vpop.xlane.xlu0 %1682
  %1684 = vadd.xlane.f32.xlu0 %v1669
  %v1685 = vpop.xlane.xlu0 %1684
  %1686 = vadd.xlane.f32.xlu0 %v1671
  %v1687 = vpop.xlane.xlu0 %1686
  %1688 = vadd.xlane.f32.xlu0 %v1673
  %v1689 = vpop.xlane.xlu0 %1688
  %v1690 = vlog2.pop %v1675
  %v1691 = vmul.f32 %v1690, 0.6931472
  %v1692 = vlog2.pop %v1677
  %v1693 = vmul.f32 %v1692, 0.6931472
  %v1694 = vlog2.pop %v1679
  %v1695 = vmul.f32 %v1694, 0.6931472
  %v1696 = vlog2.pop %v1681
  %v1697 = vmul.f32 %v1696, 0.6931472
  %v1698 = vlog2.pop %v1683
  %v1699 = vmul.f32 %v1698, 0.6931472
  %v1700 = vlog2.pop %v1685
  %v1701 = vmul.f32 %v1700, 0.6931472
  %v1702 = vlog2.pop %v1687
  %v1703 = vmul.f32 %v1702, 0.6931472
  %v1704 = vlog2.pop %v1689
  %v1705 = vmul.f32 %v1704, 0.6931472
  %v1706 = vsub.f32 %v1650, %v1691
  %v1707 = vsub.f32 %v1651, %v1693
  %v1708 = vsub.f32 %v1652, %v1695
  %v1709 = vsub.f32 %v1653, %v1697
  %v1710 = vsub.f32 %v1654, %v1699
  %v1711 = vsub.f32 %v1655, %v1701
  %v1712 = vsub.f32 %v1656, %v1703
  %v1713 = vsub.f32 %v1657, %v1705
  %1714 = vst [vmem:[%s9] sm:$0xff] %v1706
  %1715 = vst [vmem:[%s9 + $0x8] sm:$0xff] %v1707
  %1716 = vst [vmem:[%s9 + $0x10] sm:$0xff] %v1708
  %1717 = vst [vmem:[%s9 + $0x18] sm:$0xff] %v1709
  %1718 = vst [vmem:[%s9 + $0x20] sm:$0xff] %v1710
  %1719 = vst [vmem:[%s9 + $0x28] sm:$0xff] %v1711
  %1720 = vst [vmem:[%s9 + $0x30] sm:$0xff] %v1712
  %1721 = vst [vmem:[%s9 + $0x38] sm:$0xff] %v1713
  // Predicated region
  $region38: #{final_model_forward.1} parent=0 // pred_check
    _
  $region39: #{final_model_forward.1} parent=0 // pred_check_branch
    %1723 = sbr.rel (0) target = $region41
  $region40: #{final_model_forward.1} parent=0 // pred_region
    _
  $region41: #{final_model_forward.1} parent=0 // pred_fallthru
    _
  // Predicated region
  $region42: #{final_model_forward.1} parent=0 // pred_check
    _
  $region43: #{final_model_forward.1} parent=0 // pred_check_branch
    %1725 = sbr.rel (0) target = $region45
  $region44: #{final_model_forward.1} parent=0 // pred_region
    _
  $region45: #{final_model_forward.1} parent=0 // pred_fallthru
    _

</llo_original>
